<compile_context>
chip_gen: v7x
topology: tpu7x:2x2x1
jax: 0.10.0
libtpu: 0.0.40
codegen_flags: <defaults>
</compile_context>

<pallas_src>
import math
import jax
import jax.numpy as jnp
from jax.experimental import pallas as pl
from jax.experimental.pallas import tpu as pltpu

# ----- small synthetic config (roberta-base scaled down) -----
B, S, H = 2, 8, 32          # batch, seq len, hidden size
NH, HD = 4, 8               # num heads, head dim (NH * HD == H)
I = 64                      # FFN intermediate size
L = 2                       # number of encoder layers
VOCAB = 100
EPS = 1e-5
PAD_IDX = 1                 # RoBERTa padding_idx


# ---------------- in-kernel helpers ----------------
def _layer_norm(x, g, b):
    mean = jnp.mean(x, axis=-1, keepdims=True)
    var = jnp.mean(jnp.square(x - mean), axis=-1, keepdims=True)
    return (x - mean) * jax.lax.rsqrt(var + EPS) * g + b


def _gelu(x):
    # TODO(synk): HF roberta uses exact erf-GELU; tanh approximation used here (~1e-3 diff).
    return 0.5 * x * (1.0 + jnp.tanh(0.7978845608028654 * (x + 0.044715 * x * x * x)))


# ---------------- fused kernel: one grid step == (one sequence, one layer) ----------------
def fused_text_encoder_kernel(
        emb_ref,            # (S, H)      f32  word+pos+type embedding of this sequence
        mask_ref,           # (1, S)      f32  additive key mask (-1e9 on padding)
        eg_ref, eb_ref,     # (1, H)      embedding LayerNorm gamma / beta
        wqkv_ref, bqkv_ref, # (H, 3H) bf16 (Q-scale pre-folded), (1, 3H) f32
        wo_ref, bo_ref,     # (NH, HD, H) bf16 head-major rows, (1, H) f32
        ln1g_ref, ln1b_ref, # (1, H)
        w1_ref, b1_ref,     # (H, I) bf16, (1, I) f32
        w2_ref, b2_ref,     # (I, H) bf16, (1, H) f32
        ln2g_ref, ln2b_ref, # (1, H)
        o_ref,              # (S, H)      f32  last hidden state of this sequence
        h_ref):             # VMEM scratch (S, H) f32: hidden state carried across the layer axis
    l = pl.program_id(1)

    # ---- layer 0: embedding LayerNorm seeds the carried hidden state ----
    @pl.when(l == 0)
    def _init():
        h_ref[...] = _layer_norm(emb_ref[...], eg_ref[...], eb_ref[...])

    h = h_ref[...]                                                    # (S, H) f32

    # ---- self-attention: fused QKV matmul, all heads batched into one MXU call ----
    qkv = jnp.dot(h.astype(jnp.bfloat16), wqkv_ref[...],
                  preferred_element_type=jnp.float32) + bqkv_ref[...]  # (S, 3H) f32

    def heads(base):      # (S, 3H) -> (NH, S, HD): stack of lane slices (no sublane transpose)
        return jnp.stack([qkv[:, base + n * HD: base + (n + 1) * HD]
                          for n in range(NH)], axis=0).astype(jnp.bfloat16)

    qh, kh, vh = heads(0), heads(H), heads(2 * H)                     # (NH, S, HD) bf16

    # 1/sqrt(HD) scale already folded into the Q columns of wqkv at init time.
    s = jnp.einsum('hqd,hkd->hqk', qh, kh,
                   preferred_element_type=jnp.float32)                # (NH, S, S) f32
    s = s + mask_ref[...]                                             # (1, S) broadcasts over (h, q)
    m = jnp.max(s, axis=-1, keepdims=True)
    p = jnp.exp(s - m)
    p = p * pl.reciprocal(jnp.sum(p, axis=-1, keepdims=True), approx=True)
    ctx = jnp.einsum('hqk,hkd->hqd', p.astype(jnp.bfloat16), vh,
                     preferred_element_type=jnp.float32)              # (NH, S, HD) f32

    # output projection, head-batched (sum_h ctx[h] @ Wo[h]); no lane concat, no scratch
    attn = jnp.sum(jnp.einsum('hqd,hdo->hqo', ctx.astype(jnp.bfloat16), wo_ref[...],
                              preferred_element_type=jnp.float32), axis=0) + bo_ref[...]
    h1 = _layer_norm(h + attn, ln1g_ref[...], ln1b_ref[...])

    # ---- feed-forward ----
    ff = _gelu(jnp.dot(h1.astype(jnp.bfloat16), w1_ref[...],
                       preferred_element_type=jnp.float32) + b1_ref[...])
    ff = jnp.dot(ff.astype(jnp.bfloat16), w2_ref[...],
                 preferred_element_type=jnp.float32) + b2_ref[...]
    h_new = _layer_norm(h1 + ff, ln2g_ref[...], ln2b_ref[...])
    h_ref[...] = h_new

    # ---- after the last layer, write this sequence's hidden state out ----
    @pl.when(l == pl.num_programs(1) - 1)
    def _finalize():
        o_ref[...] = h_new.astype(o_ref.dtype)


# ---------------- deterministic parameter init ----------------
def init_params():
    key = jax.random.PRNGKey(0)
    keys = iter(jax.random.split(key, 3 + 4 * L))

    def nrm(shape):
        return jax.random.normal(next(keys), shape, jnp.float32) * 0.02

    word_emb = nrm((VOCAB, H))
    pos_emb = nrm((S + 2, H))            # RoBERTa position offset of 2
    type_emb = nrm((1, H))
    emb_ln_g = jnp.ones((1, H), jnp.float32)
    emb_ln_b = jnp.zeros((1, H), jnp.float32)

    wqkv, wo, w1, w2 = [], [], [], []
    for _ in range(L):
        wqkv.append(nrm((H, 3 * H)))     # fused [Wq | Wk | Wv]
        wo.append(nrm((H, H)))
        w1.append(nrm((H, I)))
        w2.append(nrm((I, H)))

    # Fold the 1/sqrt(HD) attention scale into the Q columns of the fused QKV
    # weight (when loading a real checkpoint, fold it into the Q bias as well).
    wqkv = jnp.stack(wqkv)
    wqkv = wqkv.at[:, :, :H].multiply(1.0 / math.sqrt(HD))

    bf = jnp.bfloat16                                        # MXU matmul weights in bf16
    wqkv = wqkv.astype(bf)                                   # [L, H, 3H]
    wo = jnp.stack(wo).reshape(L, NH, HD, H).astype(bf)      # [L, NH, HD, H] head-major rows
    w1 = jnp.stack(w1).astype(bf)                            # [L, H, I]
    w2 = jnp.stack(w2).astype(bf)                            # [L, I, H]

    zeros = lambda n: jnp.zeros((L, 1, n), jnp.float32)
    ones = lambda n: jnp.ones((L, 1, n), jnp.float32)
    bqkv = zeros(3 * H)                  # (Q part would also carry the folded scale)
    bo = zeros(H)
    ln1g, ln1b = ones(H), zeros(H)
    b1 = zeros(I)
    b2 = zeros(H)
    ln2g, ln2b = ones(H), zeros(H)

    return (word_emb, pos_emb, type_emb, emb_ln_g, emb_ln_b,
            wqkv, bqkv, wo, bo, ln1g, ln1b, w1, b1, w2, b2, ln2g, ln2b)


# ---------------- cost estimate (advisory, helps XLA schedule around the kernel) ----------------
def _cost_estimate():
    flops_per_tok_layer = 2 * (H * 3 * H + 2 * S * H + H * H + 2 * H * I)
    flops = L * B * S * flops_per_tok_layer
    transcendentals = L * B * (NH * S * S + S * I)                    # softmax exp + GELU tanh
    weight_bytes = L * (H * 3 * H + H * H + H * I + I * H) * 2        # bf16 weights
    small_bytes = L * (3 * H + 6 * H + I) * 4                         # biases + LN params (f32)
    act_bytes = B * L * S * H * 4 + B * S * 4 + B * S * H * 4         # emb re-reads, mask, output
    return pl.CostEstimate(flops=flops, transcendentals=transcendentals,
                           bytes_accessed=B * (weight_bytes + small_bytes) + act_bytes)


# ---------------- forward (== TextEncoder.forward -> hidden_states[-1]) ----------------
def text_encoder_forward(input_ids, attention_mask, params):
    (word_emb, pos_emb, type_emb, emb_ln_g, emb_ln_b,
     wqkv, bqkv, wo, bo, ln1g, ln1b, w1, b1, w2, b2, ln2g, ln2b) = params

    # Embedding-table gathers + position-id arithmetic stay in plain JAX (glue);
    # everything downstream runs in one fused, layer-streamed Pallas kernel.
    # TODO(synk): HF derives position ids from input_ids != padding_idx; here they come
    # from attention_mask (equivalent whenever the mask exactly marks pad tokens).
    mask_i = attention_mask.astype(jnp.int32)
    position_ids = jnp.cumsum(mask_i, axis=1) * mask_i + PAD_IDX
    emb = word_emb[input_ids] + pos_emb[position_ids] + type_emb[0][None, None, :]   # (B,S,H) f32

    mask_add = ((1.0 - attention_mask.astype(jnp.float32)) * -1e9)[:, None, :]       # (B,1,S)

    layer_w = lambda shape: pl.BlockSpec(shape, lambda b, l, _s=shape: (l,) + (0,) * (len(_s) - 1))
    shared = lambda shape: pl.BlockSpec(shape, lambda b, l, _s=shape: (0,) * len(_s))

    grid_spec = pltpu.PrefetchScalarGridSpec(
        num_scalar_prefetch=0,
        grid=(B, L),                                   # batch parallel (megacore), layers sequential
        in_specs=[
            pl.BlockSpec((None, S, H), lambda b, l: (b, 0, 0)),      # emb (per sequence)
            pl.BlockSpec((None, 1, S), lambda b, l: (b, 0, 0)),      # additive attention mask
            shared((1, H)), shared((1, H)),                           # emb LN gamma / beta
            layer_w((None, H, 3 * H)), layer_w((None, 1, 3 * H)),     # Wqkv, bqkv  (streamed per layer)
            layer_w((None, NH, HD, H)), layer_w((None, 1, H)),        # Wo (head-major), bo
            layer_w((None, 1, H)), layer_w((None, 1, H)),             # LN1 gamma / beta
            layer_w((None, H, I)), layer_w((None, 1, I)),             # W1, b1
            layer_w((None, I, H)), layer_w((None, 1, H)),             # W2, b2
            layer_w((None, 1, H)), layer_w((None, 1, H)),             # LN2 gamma / beta
        ],
        out_specs=pl.BlockSpec((None, S, H), lambda b, l: (b, 0, 0)),  # same block across the layer axis
        scratch_shapes=[pltpu.VMEM((S, H), jnp.float32)],              # carried hidden state
    )

    return pl.pallas_call(
        fused_text_encoder_kernel,
        out_shape=jax.ShapeDtypeStruct((B, S, H), jnp.float32),
        grid_spec=grid_spec,
        compiler_params=pltpu.CompilerParams(
            dimension_semantics=("parallel", "arbitrary"),
            vmem_limit_bytes=48 * 1024 * 1024,          # fits v7x's 64 MiB VMEM with dbl-buffered weights
        ),
        cost_estimate=_cost_estimate(),
    )(emb, mask_add, emb_ln_g, emb_ln_b,
      wqkv, bqkv, wo, bo, ln1g, ln1b, w1, b1, w2, b2, ln2g, ln2b)


if __name__ == "__main__":
    params = init_params()
    key = jax.random.PRNGKey(0)
    k1, _ = jax.random.split(key)
    input_ids = jax.random.randint(k1, (B, S), 0, VOCAB, dtype=jnp.int32)
    attention_mask = jnp.ones((B, S), jnp.int32).at[1, S - 2:].set(0)   # pad tail of example 1

    fwd = jax.jit(text_encoder_forward)
    out = jax.block_until_ready(fwd(input_ids, attention_mask, params))
    assert out.shape == (B, S, H) and out.dtype == jnp.float32
    assert bool(jnp.all(jnp.isfinite(out)))
    print("KERNEL_OK")
</pallas_src>

<mosaic_0001>
module attributes {stable_mosaic.version = 11 : i64} {
  func.func @fused_text_encoder_kernel(%arg0: i32, %arg1: i32, %arg2: memref<1x8x32xf32, #tpu.memory_space<vmem>>, %arg3: memref<1x1x8xf32, #tpu.memory_space<vmem>>, %arg4: memref<1x32xf32, #tpu.memory_space<vmem>>, %arg5: memref<1x32xf32, #tpu.memory_space<vmem>>, %arg6: memref<1x32x96xbf16, #tpu.memory_space<vmem>>, %arg7: memref<1x1x96xf32, #tpu.memory_space<vmem>>, %arg8: memref<1x4x8x32xbf16, #tpu.memory_space<vmem>>, %arg9: memref<1x1x32xf32, #tpu.memory_space<vmem>>, %arg10: memref<1x1x32xf32, #tpu.memory_space<vmem>>, %arg11: memref<1x1x32xf32, #tpu.memory_space<vmem>>, %arg12: memref<1x32x64xbf16, #tpu.memory_space<vmem>>, %arg13: memref<1x1x64xf32, #tpu.memory_space<vmem>>, %arg14: memref<1x64x32xbf16, #tpu.memory_space<vmem>>, %arg15: memref<1x1x32xf32, #tpu.memory_space<vmem>>, %arg16: memref<1x1x32xf32, #tpu.memory_space<vmem>>, %arg17: memref<1x1x32xf32, #tpu.memory_space<vmem>>, %arg18: memref<1x8x32xf32, #tpu.memory_space<vmem>>, %arg19: memref<8x32xf32, #tpu.memory_space<vmem>>) attributes {dimension_semantics = [#tpu.dimension_semantics<parallel>, #tpu.dimension_semantics<arbitrary>], iteration_bounds = array<i64: 2, 2>, scalar_prefetch = 0 : i64, scratch_operands = 1 : i64, tpu.core_type = #tpu.core_type<tc>, window_params = [{transform_indices = @transform_0, window_bounds = array<i64: 1, 8, 32>}, {transform_indices = @transform_1, window_bounds = array<i64: 1, 1, 8>}, {pipeline_mode = #tpu.pipeline_mode<synchronous>, transform_indices = @transform_2, window_bounds = array<i64: 1, 32>}, {pipeline_mode = #tpu.pipeline_mode<synchronous>, transform_indices = @transform_3, window_bounds = array<i64: 1, 32>}, {transform_indices = @transform_4, window_bounds = array<i64: 1, 32, 96>}, {transform_indices = @transform_5, window_bounds = array<i64: 1, 1, 96>}, {transform_indices = @transform_6, window_bounds = array<i64: 1, 4, 8, 32>}, {transform_indices = @transform_7, window_bounds = array<i64: 1, 1, 32>}, {transform_indices = @transform_8, window_bounds = array<i64: 1, 1, 32>}, {transform_indices = @transform_9, window_bounds = array<i64: 1, 1, 32>}, {transform_indices = @transform_10, window_bounds = array<i64: 1, 32, 64>}, {transform_indices = @transform_11, window_bounds = array<i64: 1, 1, 64>}, {transform_indices = @transform_12, window_bounds = array<i64: 1, 64, 32>}, {transform_indices = @transform_13, window_bounds = array<i64: 1, 1, 32>}, {transform_indices = @transform_14, window_bounds = array<i64: 1, 1, 32>}, {transform_indices = @transform_15, window_bounds = array<i64: 1, 1, 32>}, {transform_indices = @transform_16, window_bounds = array<i64: 1, 8, 32>}]} {
    %c0_i32 = arith.constant 0 : i32
    %0 = arith.cmpi eq, %arg1, %c0_i32 : i32
    %1 = arith.extui %0 : i1 to i32
    %c0_i32_0 = arith.constant 0 : i32
    %2 = arith.cmpi ne, %1, %c0_i32_0 : i32
    scf.if %2 {
      %c0_67 = arith.constant 0 : index
      %c0_68 = arith.constant 0 : index
      %c0_69 = arith.constant 0 : index
      %156 = vector.load %arg2[%c0_67, %c0_68, %c0_69] : memref<1x8x32xf32, #tpu.memory_space<vmem>>, vector<1x8x32xf32>
      %157 = vector.shape_cast %156 : vector<1x8x32xf32> to vector<8x32xf32>
      %c0_70 = arith.constant 0 : index
      %c0_71 = arith.constant 0 : index
      %158 = vector.load %arg4[%c0_70, %c0_71] : memref<1x32xf32, #tpu.memory_space<vmem>>, vector<1x32xf32>
      %c0_72 = arith.constant 0 : index
      %c0_73 = arith.constant 0 : index
      %159 = vector.load %arg5[%c0_72, %c0_73] : memref<1x32xf32, #tpu.memory_space<vmem>>, vector<1x32xf32>
      %cst_74 = arith.constant dense<0.000000e+00> : vector<8xf32>
      %160 = vector.multi_reduction <add>, %157, %cst_74 [1] : vector<8x32xf32> to vector<8xf32>
      %161 = vector.shape_cast %160 : vector<8xf32> to vector<8x1xf32>
      %cst_75 = arith.constant 3.200000e+01 : f32
      %162 = vector.broadcast %cst_75 : f32 to vector<8x1xf32>
      %163 = arith.divf %161, %162 : vector<8x1xf32>
      %164 = vector.broadcast %163 : vector<8x1xf32> to vector<8x32xf32>
      %165 = arith.subf %157, %164 : vector<8x32xf32>
      %166 = arith.mulf %165, %165 : vector<8x32xf32>
      %cst_76 = arith.constant dense<0.000000e+00> : vector<8xf32>
      %167 = vector.multi_reduction <add>, %166, %cst_76 [1] : vector<8x32xf32> to vector<8xf32>
      %168 = vector.shape_cast %167 : vector<8xf32> to vector<8x1xf32>
      %cst_77 = arith.constant 3.200000e+01 : f32
      %169 = vector.broadcast %cst_77 : f32 to vector<8x1xf32>
      %170 = arith.divf %168, %169 : vector<8x1xf32>
      %171 = vector.broadcast %163 : vector<8x1xf32> to vector<8x32xf32>
      %172 = arith.subf %157, %171 : vector<8x32xf32>
      %cst_78 = arith.constant 9.99999974E-6 : f32
      %173 = vector.broadcast %cst_78 : f32 to vector<8x1xf32>
      %174 = arith.addf %170, %173 : vector<8x1xf32>
      %175 = math.rsqrt %174 : vector<8x1xf32>
      %176 = vector.broadcast %175 : vector<8x1xf32> to vector<8x32xf32>
      %177 = arith.mulf %172, %176 : vector<8x32xf32>
      %178 = vector.broadcast %158 : vector<1x32xf32> to vector<8x32xf32>
      %179 = arith.mulf %177, %178 : vector<8x32xf32>
      %180 = vector.broadcast %159 : vector<1x32xf32> to vector<8x32xf32>
      %181 = arith.addf %179, %180 : vector<8x32xf32>
      %c0_79 = arith.constant 0 : index
      %c0_80 = arith.constant 0 : index
      %182 = vector.load %arg19[%c0_79, %c0_80] : memref<8x32xf32, #tpu.memory_space<vmem>>, vector<8x32xf32>
      tpu.vector_store %arg19[%c0_79, %c0_80], %181 {strides = array<i32>} : memref<8x32xf32, #tpu.memory_space<vmem>>, vector<8x32xf32>,
    } else {
    }
    %c0 = arith.constant 0 : index
    %c0_1 = arith.constant 0 : index
    %3 = vector.load %arg19[%c0, %c0_1] : memref<8x32xf32, #tpu.memory_space<vmem>>, vector<8x32xf32>
    %4 = arith.truncf %3 : vector<8x32xf32> to vector<8x32xbf16>
    %c0_2 = arith.constant 0 : index
    %c0_3 = arith.constant 0 : index
    %c0_4 = arith.constant 0 : index
    %5 = vector.load %arg6[%c0_2, %c0_3, %c0_4] : memref<1x32x96xbf16, #tpu.memory_space<vmem>>, vector<1x32x96xbf16>
    %6 = vector.shape_cast %5 : vector<1x32x96xbf16> to vector<32x96xbf16>
    %cst = arith.constant dense<0.000000e+00> : vector<8x96xf32>
    %7 = tpu.matmul %4, %6, %cst {dimension_numbers = #tpu.dot_dimension_numbers<[1], [0], [0], [1], [0, 0, 1, 1], [], []>} : vector<8x32xbf16>, vector<32x96xbf16>, vector<8x96xf32> -> vector<8x96xf32>
    %c0_5 = arith.constant 0 : index
    %c0_6 = arith.constant 0 : index
    %c0_7 = arith.constant 0 : index
    %8 = vector.load %arg7[%c0_5, %c0_6, %c0_7] : memref<1x1x96xf32, #tpu.memory_space<vmem>>, vector<1x1x96xf32>
    %9 = vector.shape_cast %8 : vector<1x1x96xf32> to vector<1x96xf32>
    %10 = vector.broadcast %9 : vector<1x96xf32> to vector<8x96xf32>
    %11 = arith.addf %7, %10 : vector<8x96xf32>
    %12 = vector.extract_strided_slice %11 {offsets = [0, 0], sizes = [8, 8], strides = [1, 1]} : vector<8x96xf32> to vector<8x8xf32>
    %13 = vector.extract_strided_slice %11 {offsets = [0, 8], sizes = [8, 8], strides = [1, 1]} : vector<8x96xf32> to vector<8x8xf32>
    %14 = vector.extract_strided_slice %11 {offsets = [0, 16], sizes = [8, 8], strides = [1, 1]} : vector<8x96xf32> to vector<8x8xf32>
    %15 = vector.extract_strided_slice %11 {offsets = [0, 24], sizes = [8, 8], strides = [1, 1]} : vector<8x96xf32> to vector<8x8xf32>
    %16 = vector.shape_cast %12 : vector<8x8xf32> to vector<1x8x8xf32>
    %17 = vector.shape_cast %13 : vector<8x8xf32> to vector<1x8x8xf32>
    %18 = vector.shape_cast %14 : vector<8x8xf32> to vector<1x8x8xf32>
    %19 = vector.shape_cast %15 : vector<8x8xf32> to vector<1x8x8xf32>
    %20 = tpu.concatenate %16, %17, %18, %19 in 0 : vector<1x8x8xf32>, vector<1x8x8xf32>, vector<1x8x8xf32>, vector<1x8x8xf32> -> vector<4x8x8xf32>
    %21 = arith.truncf %20 : vector<4x8x8xf32> to vector<4x8x8xbf16>
    %22 = vector.extract_strided_slice %11 {offsets = [0, 32], sizes = [8, 8], strides = [1, 1]} : vector<8x96xf32> to vector<8x8xf32>
    %23 = vector.extract_strided_slice %11 {offsets = [0, 40], sizes = [8, 8], strides = [1, 1]} : vector<8x96xf32> to vector<8x8xf32>
    %24 = vector.extract_strided_slice %11 {offsets = [0, 48], sizes = [8, 8], strides = [1, 1]} : vector<8x96xf32> to vector<8x8xf32>
    %25 = vector.extract_strided_slice %11 {offsets = [0, 56], sizes = [8, 8], strides = [1, 1]} : vector<8x96xf32> to vector<8x8xf32>
    %26 = vector.shape_cast %22 : vector<8x8xf32> to vector<1x8x8xf32>
    %27 = vector.shape_cast %23 : vector<8x8xf32> to vector<1x8x8xf32>
    %28 = vector.shape_cast %24 : vector<8x8xf32> to vector<1x8x8xf32>
    %29 = vector.shape_cast %25 : vector<8x8xf32> to vector<1x8x8xf32>
    %30 = tpu.concatenate %26, %27, %28, %29 in 0 : vector<1x8x8xf32>, vector<1x8x8xf32>, vector<1x8x8xf32>, vector<1x8x8xf32> -> vector<4x8x8xf32>
    %31 = arith.truncf %30 : vector<4x8x8xf32> to vector<4x8x8xbf16>
    %32 = vector.extract_strided_slice %11 {offsets = [0, 64], sizes = [8, 8], strides = [1, 1]} : vector<8x96xf32> to vector<8x8xf32>
    %33 = vector.extract_strided_slice %11 {offsets = [0, 72], sizes = [8, 8], strides = [1, 1]} : vector<8x96xf32> to vector<8x8xf32>
    %34 = vector.extract_strided_slice %11 {offsets = [0, 80], sizes = [8, 8], strides = [1, 1]} : vector<8x96xf32> to vector<8x8xf32>
    %35 = vector.extract_strided_slice %11 {offsets = [0, 88], sizes = [8, 8], strides = [1, 1]} : vector<8x96xf32> to vector<8x8xf32>
    %36 = vector.shape_cast %32 : vector<8x8xf32> to vector<1x8x8xf32>
    %37 = vector.shape_cast %33 : vector<8x8xf32> to vector<1x8x8xf32>
    %38 = vector.shape_cast %34 : vector<8x8xf32> to vector<1x8x8xf32>
    %39 = vector.shape_cast %35 : vector<8x8xf32> to vector<1x8x8xf32>
    %40 = tpu.concatenate %36, %37, %38, %39 in 0 : vector<1x8x8xf32>, vector<1x8x8xf32>, vector<1x8x8xf32>, vector<1x8x8xf32> -> vector<4x8x8xf32>
    %41 = arith.truncf %40 : vector<4x8x8xf32> to vector<4x8x8xbf16>
    "tpu.trace_start"() <{level = 10 : i32, message = "hqd,hkd->hqk"}> : () -> ()
    %cst_8 = arith.constant dense<0.000000e+00> : vector<4x8x8xf32>
    %42 = tpu.matmul %21, %31, %cst_8 {dimension_numbers = #tpu.dot_dimension_numbers<[2], [2], [1], [1], [0, 0, 0, 1, 1, 1], [0], [0]>} : vector<4x8x8xbf16>, vector<4x8x8xbf16>, vector<4x8x8xf32> -> vector<4x8x8xf32>
    "tpu.trace_stop"() : () -> ()
    %c0_9 = arith.constant 0 : index
    %c0_10 = arith.constant 0 : index
    %c0_11 = arith.constant 0 : index
    %43 = vector.load %arg3[%c0_9, %c0_10, %c0_11] : memref<1x1x8xf32, #tpu.memory_space<vmem>>, vector<1x1x8xf32>
    %44 = vector.shape_cast %43 : vector<1x1x8xf32> to vector<1x8xf32>
    %45 = vector.shape_cast %44 : vector<1x8xf32> to vector<1x1x8xf32>
    %46 = vector.broadcast %45 : vector<1x1x8xf32> to vector<4x8x8xf32>
    %47 = arith.addf %42, %46 : vector<4x8x8xf32>
    %cst_12 = arith.constant dense<0xFF800000> : vector<4x8xf32>
    %48 = vector.multi_reduction <maximumf>, %47, %cst_12 [2] : vector<4x8x8xf32> to vector<4x8xf32>
    %49 = vector.shape_cast %48 : vector<4x8xf32> to vector<4x8x1xf32>
    %50 = vector.broadcast %49 : vector<4x8x1xf32> to vector<4x8x8xf32>
    %51 = arith.subf %47, %50 : vector<4x8x8xf32>
    %52 = math.exp %51 : vector<4x8x8xf32>
    %cst_13 = arith.constant dense<0.000000e+00> : vector<4x8xf32>
    %53 = vector.multi_reduction <add>, %52, %cst_13 [2] : vector<4x8x8xf32> to vector<4x8xf32>
    %54 = vector.shape_cast %53 : vector<4x8xf32> to vector<4x8x1xf32>
    %55 = tpu.reciprocal %54 {approx = true} : vector<4x8x1xf32> -> vector<4x8x1xf32>
    %56 = vector.broadcast %55 : vector<4x8x1xf32> to vector<4x8x8xf32>
    %57 = arith.mulf %52, %56 : vector<4x8x8xf32>
    %58 = arith.truncf %57 : vector<4x8x8xf32> to vector<4x8x8xbf16>
    "tpu.trace_start"() <{level = 10 : i32, message = "hqk,hkd->hqd"}> : () -> ()
    %cst_14 = arith.constant dense<0.000000e+00> : vector<4x8x8xf32>
    %59 = tpu.matmul %58, %41, %cst_14 {dimension_numbers = #tpu.dot_dimension_numbers<[2], [1], [1], [2], [0, 0, 0, 1, 1, 2], [0], [0]>} : vector<4x8x8xbf16>, vector<4x8x8xbf16>, vector<4x8x8xf32> -> vector<4x8x8xf32>
    "tpu.trace_stop"() : () -> ()
    %60 = arith.truncf %59 : vector<4x8x8xf32> to vector<4x8x8xbf16>
    %c0_15 = arith.constant 0 : index
    %c0_16 = arith.constant 0 : index
    %c0_17 = arith.constant 0 : index
    %c0_18 = arith.constant 0 : index
    %61 = vector.load %arg8[%c0_15, %c0_16, %c0_17, %c0_18] : memref<1x4x8x32xbf16, #tpu.memory_space<vmem>>, vector<1x4x8x32xbf16>
    %62 = vector.shape_cast %61 : vector<1x4x8x32xbf16> to vector<4x8x32xbf16>
    "tpu.trace_start"() <{level = 10 : i32, message = "hqd,hdo->hqo"}> : () -> ()
    %cst_19 = arith.constant dense<0.000000e+00> : vector<4x8x32xf32>
    %63 = tpu.matmul %60, %62, %cst_19 {dimension_numbers = #tpu.dot_dimension_numbers<[2], [1], [1], [2], [0, 0, 0, 1, 1, 2], [0], [0]>} : vector<4x8x8xbf16>, vector<4x8x32xbf16>, vector<4x8x32xf32> -> vector<4x8x32xf32>
    "tpu.trace_stop"() : () -> ()
    %cst_20 = arith.constant dense<0.000000e+00> : vector<8x32xf32>
    %64 = vector.multi_reduction <add>, %63, %cst_20 [0] : vector<4x8x32xf32> to vector<8x32xf32>
    %c0_21 = arith.constant 0 : index
    %c0_22 = arith.constant 0 : index
    %c0_23 = arith.constant 0 : index
    %65 = vector.load %arg9[%c0_21, %c0_22, %c0_23] : memref<1x1x32xf32, #tpu.memory_space<vmem>>, vector<1x1x32xf32>
    %66 = vector.shape_cast %65 : vector<1x1x32xf32> to vector<1x32xf32>
    %67 = vector.broadcast %66 : vector<1x32xf32> to vector<8x32xf32>
    %68 = arith.addf %64, %67 : vector<8x32xf32>
    %69 = arith.addf %3, %68 : vector<8x32xf32>
    %c0_24 = arith.constant 0 : index
    %c0_25 = arith.constant 0 : index
    %c0_26 = arith.constant 0 : index
    %70 = vector.load %arg10[%c0_24, %c0_25, %c0_26] : memref<1x1x32xf32, #tpu.memory_space<vmem>>, vector<1x1x32xf32>
    %71 = vector.shape_cast %70 : vector<1x1x32xf32> to vector<1x32xf32>
    %c0_27 = arith.constant 0 : index
    %c0_28 = arith.constant 0 : index
    %c0_29 = arith.constant 0 : index
    %72 = vector.load %arg11[%c0_27, %c0_28, %c0_29] : memref<1x1x32xf32, #tpu.memory_space<vmem>>, vector<1x1x32xf32>
    %73 = vector.shape_cast %72 : vector<1x1x32xf32> to vector<1x32xf32>
    %cst_30 = arith.constant dense<0.000000e+00> : vector<8xf32>
    %74 = vector.multi_reduction <add>, %69, %cst_30 [1] : vector<8x32xf32> to vector<8xf32>
    %75 = vector.shape_cast %74 : vector<8xf32> to vector<8x1xf32>
    %cst_31 = arith.constant 3.200000e+01 : f32
    %76 = vector.broadcast %cst_31 : f32 to vector<8x1xf32>
    %77 = arith.divf %75, %76 : vector<8x1xf32>
    %78 = vector.broadcast %77 : vector<8x1xf32> to vector<8x32xf32>
    %79 = arith.subf %69, %78 : vector<8x32xf32>
    %80 = arith.mulf %79, %79 : vector<8x32xf32>
    %cst_32 = arith.constant dense<0.000000e+00> : vector<8xf32>
    %81 = vector.multi_reduction <add>, %80, %cst_32 [1] : vector<8x32xf32> to vector<8xf32>
    %82 = vector.shape_cast %81 : vector<8xf32> to vector<8x1xf32>
    %cst_33 = arith.constant 3.200000e+01 : f32
    %83 = vector.broadcast %cst_33 : f32 to vector<8x1xf32>
    %84 = arith.divf %82, %83 : vector<8x1xf32>
    %85 = vector.broadcast %77 : vector<8x1xf32> to vector<8x32xf32>
    %86 = arith.subf %69, %85 : vector<8x32xf32>
    %cst_34 = arith.constant 9.99999974E-6 : f32
    %87 = vector.broadcast %cst_34 : f32 to vector<8x1xf32>
    %88 = arith.addf %84, %87 : vector<8x1xf32>
    %89 = math.rsqrt %88 : vector<8x1xf32>
    %90 = vector.broadcast %89 : vector<8x1xf32> to vector<8x32xf32>
    %91 = arith.mulf %86, %90 : vector<8x32xf32>
    %92 = vector.broadcast %71 : vector<1x32xf32> to vector<8x32xf32>
    %93 = arith.mulf %91, %92 : vector<8x32xf32>
    %94 = vector.broadcast %73 : vector<1x32xf32> to vector<8x32xf32>
    %95 = arith.addf %93, %94 : vector<8x32xf32>
    %96 = arith.truncf %95 : vector<8x32xf32> to vector<8x32xbf16>
    %c0_35 = arith.constant 0 : index
    %c0_36 = arith.constant 0 : index
    %c0_37 = arith.constant 0 : index
    %97 = vector.load %arg12[%c0_35, %c0_36, %c0_37] : memref<1x32x64xbf16, #tpu.memory_space<vmem>>, vector<1x32x64xbf16>
    %98 = vector.shape_cast %97 : vector<1x32x64xbf16> to vector<32x64xbf16>
    %cst_38 = arith.constant dense<0.000000e+00> : vector<8x64xf32>
    %99 = tpu.matmul %96, %98, %cst_38 {dimension_numbers = #tpu.dot_dimension_numbers<[1], [0], [0], [1], [0, 0, 1, 1], [], []>} : vector<8x32xbf16>, vector<32x64xbf16>, vector<8x64xf32> -> vector<8x64xf32>
    %c0_39 = arith.constant 0 : index
    %c0_40 = arith.constant 0 : index
    %c0_41 = arith.constant 0 : index
    %100 = vector.load %arg13[%c0_39, %c0_40, %c0_41] : memref<1x1x64xf32, #tpu.memory_space<vmem>>, vector<1x1x64xf32>
    %101 = vector.shape_cast %100 : vector<1x1x64xf32> to vector<1x64xf32>
    %102 = vector.broadcast %101 : vector<1x64xf32> to vector<8x64xf32>
    %103 = arith.addf %99, %102 : vector<8x64xf32>
    %cst_42 = arith.constant 5.000000e-01 : f32
    %104 = vector.broadcast %cst_42 : f32 to vector<8x64xf32>
    %105 = arith.mulf %104, %103 : vector<8x64xf32>
    %cst_43 = arith.constant 4.471500e-02 : f32
    %106 = vector.broadcast %cst_43 : f32 to vector<8x64xf32>
    %107 = arith.mulf %106, %103 : vector<8x64xf32>
    %108 = arith.mulf %107, %103 : vector<8x64xf32>
    %109 = arith.mulf %108, %103 : vector<8x64xf32>
    %110 = arith.addf %103, %109 : vector<8x64xf32>
    %cst_44 = arith.constant 0.797884583 : f32
    %111 = vector.broadcast %cst_44 : f32 to vector<8x64xf32>
    %112 = arith.mulf %111, %110 : vector<8x64xf32>
    %113 = math.tanh %112 : vector<8x64xf32>
    %cst_45 = arith.constant 1.000000e+00 : f32
    %114 = vector.broadcast %cst_45 : f32 to vector<8x64xf32>
    %115 = arith.addf %114, %113 : vector<8x64xf32>
    %116 = arith.mulf %105, %115 : vector<8x64xf32>
    %117 = arith.truncf %116 : vector<8x64xf32> to vector<8x64xbf16>
    %c0_46 = arith.constant 0 : index
    %c0_47 = arith.constant 0 : index
    %c0_48 = arith.constant 0 : index
    %118 = vector.load %arg14[%c0_46, %c0_47, %c0_48] : memref<1x64x32xbf16, #tpu.memory_space<vmem>>, vector<1x64x32xbf16>
    %119 = vector.shape_cast %118 : vector<1x64x32xbf16> to vector<64x32xbf16>
    %cst_49 = arith.constant dense<0.000000e+00> : vector<8x32xf32>
    %120 = tpu.matmul %117, %119, %cst_49 {dimension_numbers = #tpu.dot_dimension_numbers<[1], [0], [0], [1], [0, 0, 1, 1], [], []>} : vector<8x64xbf16>, vector<64x32xbf16>, vector<8x32xf32> -> vector<8x32xf32>
    %c0_50 = arith.constant 0 : index
    %c0_51 = arith.constant 0 : index
    %c0_52 = arith.constant 0 : index
    %121 = vector.load %arg15[%c0_50, %c0_51, %c0_52] : memref<1x1x32xf32, #tpu.memory_space<vmem>>, vector<1x1x32xf32>
    %122 = vector.shape_cast %121 : vector<1x1x32xf32> to vector<1x32xf32>
    %123 = vector.broadcast %122 : vector<1x32xf32> to vector<8x32xf32>
    %124 = arith.addf %120, %123 : vector<8x32xf32>
    %125 = arith.addf %95, %124 : vector<8x32xf32>
    %c0_53 = arith.constant 0 : index
    %c0_54 = arith.constant 0 : index
    %c0_55 = arith.constant 0 : index
    %126 = vector.load %arg16[%c0_53, %c0_54, %c0_55] : memref<1x1x32xf32, #tpu.memory_space<vmem>>, vector<1x1x32xf32>
    %127 = vector.shape_cast %126 : vector<1x1x32xf32> to vector<1x32xf32>
    %c0_56 = arith.constant 0 : index
    %c0_57 = arith.constant 0 : index
    %c0_58 = arith.constant 0 : index
    %128 = vector.load %arg17[%c0_56, %c0_57, %c0_58] : memref<1x1x32xf32, #tpu.memory_space<vmem>>, vector<1x1x32xf32>
    %129 = vector.shape_cast %128 : vector<1x1x32xf32> to vector<1x32xf32>
    %cst_59 = arith.constant dense<0.000000e+00> : vector<8xf32>
    %130 = vector.multi_reduction <add>, %125, %cst_59 [1] : vector<8x32xf32> to vector<8xf32>
    %131 = vector.shape_cast %130 : vector<8xf32> to vector<8x1xf32>
    %cst_60 = arith.constant 3.200000e+01 : f32
    %132 = vector.broadcast %cst_60 : f32 to vector<8x1xf32>
    %133 = arith.divf %131, %132 : vector<8x1xf32>
    %134 = vector.broadcast %133 : vector<8x1xf32> to vector<8x32xf32>
    %135 = arith.subf %125, %134 : vector<8x32xf32>
    %136 = arith.mulf %135, %135 : vector<8x32xf32>
    %cst_61 = arith.constant dense<0.000000e+00> : vector<8xf32>
    %137 = vector.multi_reduction <add>, %136, %cst_61 [1] : vector<8x32xf32> to vector<8xf32>
    %138 = vector.shape_cast %137 : vector<8xf32> to vector<8x1xf32>
    %cst_62 = arith.constant 3.200000e+01 : f32
    %139 = vector.broadcast %cst_62 : f32 to vector<8x1xf32>
    %140 = arith.divf %138, %139 : vector<8x1xf32>
    %141 = vector.broadcast %133 : vector<8x1xf32> to vector<8x32xf32>
    %142 = arith.subf %125, %141 : vector<8x32xf32>
    %cst_63 = arith.constant 9.99999974E-6 : f32
    %143 = vector.broadcast %cst_63 : f32 to vector<8x1xf32>
    %144 = arith.addf %140, %143 : vector<8x1xf32>
    %145 = math.rsqrt %144 : vector<8x1xf32>
    %146 = vector.broadcast %145 : vector<8x1xf32> to vector<8x32xf32>
    %147 = arith.mulf %142, %146 : vector<8x32xf32>
    %148 = vector.broadcast %127 : vector<1x32xf32> to vector<8x32xf32>
    %149 = arith.mulf %147, %148 : vector<8x32xf32>
    %150 = vector.broadcast %129 : vector<1x32xf32> to vector<8x32xf32>
    %151 = arith.addf %149, %150 : vector<8x32xf32>
    %c0_64 = arith.constant 0 : index
    %c0_65 = arith.constant 0 : index
    %152 = vector.load %arg19[%c0_64, %c0_65] : memref<8x32xf32, #tpu.memory_space<vmem>>, vector<8x32xf32>
    tpu.vector_store %arg19[%c0_64, %c0_65], %151 {strides = array<i32>} : memref<8x32xf32, #tpu.memory_space<vmem>>, vector<8x32xf32>,
    %c1_i32 = arith.constant 1 : i32
    %153 = arith.cmpi eq, %arg1, %c1_i32 : i32
    %154 = arith.extui %153 : i1 to i32
    %c0_i32_66 = arith.constant 0 : i32
    %155 = arith.cmpi ne, %154, %c0_i32_66 : i32
    scf.if %155 {
      %c0_67 = arith.constant 0 : index
      %c0_68 = arith.constant 0 : index
      %c0_69 = arith.constant 0 : index
      %156 = vector.load %arg18[%c0_67, %c0_68, %c0_69] : memref<1x8x32xf32, #tpu.memory_space<vmem>>, vector<1x8x32xf32>
      %157 = vector.shape_cast %156 : vector<1x8x32xf32> to vector<8x32xf32>
      %158 = vector.shape_cast %151 : vector<8x32xf32> to vector<1x8x32xf32>
      tpu.vector_store %arg18[%c0_67, %c0_68, %c0_69], %158 {strides = array<i32>} : memref<1x8x32xf32, #tpu.memory_space<vmem>>, vector<1x8x32xf32>,
    } else {
    }
    return
  }
  func.func @transform_0(%arg0: i32, %arg1: i32) -> (i32, i32, i32) {
    %c0_i32 = arith.constant 0 : i32
    %c0_i32_0 = arith.constant 0 : i32
    %c0_i32_1 = arith.constant 0 : i32
    return %arg0, %c0_i32, %c0_i32_0 : i32, i32, i32
  }
  func.func @transform_1(%arg0: i32, %arg1: i32) -> (i32, i32, i32) {
    %c0_i32 = arith.constant 0 : i32
    %c0_i32_0 = arith.constant 0 : i32
    %c0_i32_1 = arith.constant 0 : i32
    return %arg0, %c0_i32, %c0_i32_0 : i32, i32, i32
  }
  func.func @transform_2(%arg0: i32, %arg1: i32) -> (i32, i32) {
    %c0_i32 = arith.constant 0 : i32
    %c0_i32_0 = arith.constant 0 : i32
    %c0_i32_1 = arith.constant 0 : i32
    return %c0_i32, %c0_i32_0 : i32, i32
  }
  func.func @transform_3(%arg0: i32, %arg1: i32) -> (i32, i32) {
    %c0_i32 = arith.constant 0 : i32
    %c0_i32_0 = arith.constant 0 : i32
    %c0_i32_1 = arith.constant 0 : i32
    return %c0_i32, %c0_i32_0 : i32, i32
  }
  func.func @transform_4(%arg0: i32, %arg1: i32) -> (i32, i32, i32) {
    %c0_i32 = arith.constant 0 : i32
    %c0_i32_0 = arith.constant 0 : i32
    %c0_i32_1 = arith.constant 0 : i32
    return %arg1, %c0_i32, %c0_i32_0 : i32, i32, i32
  }
  func.func @transform_5(%arg0: i32, %arg1: i32) -> (i32, i32, i32) {
    %c0_i32 = arith.constant 0 : i32
    %c0_i32_0 = arith.constant 0 : i32
    %c0_i32_1 = arith.constant 0 : i32
    return %arg1, %c0_i32, %c0_i32_0 : i32, i32, i32
  }
  func.func @transform_6(%arg0: i32, %arg1: i32) -> (i32, i32, i32, i32) {
    %c0_i32 = arith.constant 0 : i32
    %c0_i32_0 = arith.constant 0 : i32
    %c0_i32_1 = arith.constant 0 : i32
    %c0_i32_2 = arith.constant 0 : i32
    return %arg1, %c0_i32, %c0_i32_0, %c0_i32_1 : i32, i32, i32, i32
  }
  func.func @transform_7(%arg0: i32, %arg1: i32) -> (i32, i32, i32) {
    %c0_i32 = arith.constant 0 : i32
    %c0_i32_0 = arith.constant 0 : i32
    %c0_i32_1 = arith.constant 0 : i32
    return %arg1, %c0_i32, %c0_i32_0 : i32, i32, i32
  }
  func.func @transform_8(%arg0: i32, %arg1: i32) -> (i32, i32, i32) {
    %c0_i32 = arith.constant 0 : i32
    %c0_i32_0 = arith.constant 0 : i32
    %c0_i32_1 = arith.constant 0 : i32
    return %arg1, %c0_i32, %c0_i32_0 : i32, i32, i32
  }
  func.func @transform_9(%arg0: i32, %arg1: i32) -> (i32, i32, i32) {
    %c0_i32 = arith.constant 0 : i32
    %c0_i32_0 = arith.constant 0 : i32
    %c0_i32_1 = arith.constant 0 : i32
    return %arg1, %c0_i32, %c0_i32_0 : i32, i32, i32
  }
  func.func @transform_10(%arg0: i32, %arg1: i32) -> (i32, i32, i32) {
    %c0_i32 = arith.constant 0 : i32
    %c0_i32_0 = arith.constant 0 : i32
    %c0_i32_1 = arith.constant 0 : i32
    return %arg1, %c0_i32, %c0_i32_0 : i32, i32, i32
  }
  func.func @transform_11(%arg0: i32, %arg1: i32) -> (i32, i32, i32) {
    %c0_i32 = arith.constant 0 : i32
    %c0_i32_0 = arith.constant 0 : i32
    %c0_i32_1 = arith.constant 0 : i32
    return %arg1, %c0_i32, %c0_i32_0 : i32, i32, i32
  }
  func.func @transform_12(%arg0: i32, %arg1: i32) -> (i32, i32, i32) {
    %c0_i32 = arith.constant 0 : i32
    %c0_i32_0 = arith.constant 0 : i32
    %c0_i32_1 = arith.constant 0 : i32
    return %arg1, %c0_i32, %c0_i32_0 : i32, i32, i32
  }
  func.func @transform_13(%arg0: i32, %arg1: i32) -> (i32, i32, i32) {
    %c0_i32 = arith.constant 0 : i32
    %c0_i32_0 = arith.constant 0 : i32
    %c0_i32_1 = arith.constant 0 : i32
    return %arg1, %c0_i32, %c0_i32_0 : i32, i32, i32
  }
  func.func @transform_14(%arg0: i32, %arg1: i32) -> (i32, i32, i32) {
    %c0_i32 = arith.constant 0 : i32
    %c0_i32_0 = arith.constant 0 : i32
    %c0_i32_1 = arith.constant 0 : i32
    return %arg1, %c0_i32, %c0_i32_0 : i32, i32, i32
  }
  func.func @transform_15(%arg0: i32, %arg1: i32) -> (i32, i32, i32) {
    %c0_i32 = arith.constant 0 : i32
    %c0_i32_0 = arith.constant 0 : i32
    %c0_i32_1 = arith.constant 0 : i32
    return %arg1, %c0_i32, %c0_i32_0 : i32, i32, i32
  }
  func.func @transform_16(%arg0: i32, %arg1: i32) -> (i32, i32, i32) {
    %c0_i32 = arith.constant 0 : i32
    %c0_i32_0 = arith.constant 0 : i32
    %c0_i32_1 = arith.constant 0 : i32
    return %arg0, %c0_i32, %c0_i32_0 : i32, i32, i32
  }
}

</mosaic_0001>

<llo_original>
// kernel: text_encoder_forward.1
$region0: #{text_encoder_forward.1}
  #allocation0 [shape = 'u32[]', space=smem, size = 0x4, offset = 0x4, fixed_abs, tag = 'smem constant byte address 0x4 - core index']
  #allocation1 [shape = 'u32[144,128]{1,0:T(1,128)}', space=vmem, size = 0x12000, scoped, tag = 'internal scratch']
  #allocation2 [shape = 'f32[8,32]{1,0:T(8,128)}', space=vmem, size = 0x1000, scoped, tag = 'scratch operand']
  %s0 = inlined_call_operand.vmem [shape: f32[2,8,32], index: 0, kind: input, shape index: {}]
  %s1 = inlined_call_operand.vmem [shape: f32[2,1,8], index: 1, kind: input, shape index: {}]
  %s2 = inlined_call_operand.vmem [shape: f32[1,32], index: 2, kind: input, shape index: {}]
  %s3 = inlined_call_operand.vmem [shape: f32[1,32], index: 3, kind: input, shape index: {}]
  %s4 = inlined_call_operand.vmem [shape: bf16[2,32,96], index: 4, kind: input, shape index: {}]
  %s5 = inlined_call_operand.vmem [shape: f32[2,1,96], index: 5, kind: input, shape index: {}]
  %s6 = inlined_call_operand.vmem [shape: bf16[2,4,8,32], index: 6, kind: input, shape index: {}]
  %s7 = inlined_call_operand.vmem [shape: f32[2,1,32], index: 7, kind: input, shape index: {}]
  %s8 = inlined_call_operand.vmem [shape: f32[2,1,32], index: 8, kind: input, shape index: {}]
  %s9 = inlined_call_operand.vmem [shape: f32[2,1,32], index: 9, kind: input, shape index: {}]
  %s10 = inlined_call_operand.vmem [shape: bf16[2,32,64], index: 10, kind: input, shape index: {}]
  %s11 = inlined_call_operand.vmem [shape: f32[2,1,64], index: 11, kind: input, shape index: {}]
  %s12 = inlined_call_operand.vmem [shape: bf16[2,64,32], index: 12, kind: input, shape index: {}]
  %s13 = inlined_call_operand.vmem [shape: f32[2,1,32], index: 13, kind: input, shape index: {}]
  %s14 = inlined_call_operand.vmem [shape: f32[2,1,32], index: 14, kind: input, shape index: {}]
  %s15 = inlined_call_operand.vmem [shape: f32[2,1,32], index: 15, kind: input, shape index: {}]
  %s16 = inlined_call_operand.hbm [shape: f32[2,8,32], index: 16, kind: output, shape index: {}]
  %s17 = sld [smem:[#allocation0]]
  $region105: #{text_encoder_forward.1} parent=0
    _
  %s19 = ssub.s32 1, %s17
  %s20 = scalar_select 0, %s19, %s17
  $region1: #{text_encoder_forward.1} parent=0
    #allocation3 [shape = 'u8[8192]{0}', space=vmem, size = 0x2000, scoped, tag = 'output window, operand 0']
    #allocation4 [shape = 's32[2]{0}', space=sflag, size = 0x8, scoped, tag = 'scoped memory for text_encoder_forward.1']
    %21 = vsyncpa [#allocation4], 0
    %s22 = scalar_lea.sflag [#allocation4], 1
    %23 = vsyncpa %s22, 0
    loop: start=0, step=1, limit=6
    $region2: #{text_encoder_forward.1} parent=1 // loop_pre_header
      _
    $region3: #{text_encoder_forward.1} parent=1 // loop_header
      %s25 = sphi 0, %s29
      %p26 = scmp.ge.s32.totalorder %s25, 6
      %s32 = sphi 0, %s44
      %s33 = sphi 0, %s40
      %s34 = sphi 0, %s32
      %s35 = sphi 0, %s33
      %s36 = sphi 0, %s34
      %s37 = sphi 0, %s35
      %s47 = sphi 0, %s49
      %s50 = sphi 0, %s47
      %s51 = sphi 0, %s50
      %s67 = sphi 0, %s51
      %s73 = sphi 0, %s75
      %s76 = sphi 0, %s73
      %s77 = sphi 0, %s76
      %s93 = sphi 0, %s77
      %s97 = sphi 0, %s97
      %s99 = sphi 0, %s97
      %s100 = sphi 0, %s99
      %s114 = sphi 0, %s100
      %s118 = sphi 0, %s118
      %s120 = sphi 0, %s118
      %s121 = sphi 0, %s120
      %s135 = sphi 0, %s121
      %s141 = sphi 0, %s143
      %s144 = sphi 0, %s141
      %s145 = sphi 0, %s144
      %s161 = sphi 0, %s145
      %s167 = sphi 0, %s169
      %s170 = sphi 0, %s167
      %s171 = sphi 0, %s170
      %s187 = sphi 0, %s171
      %s193 = sphi 0, %s195
      %s196 = sphi 0, %s193
      %s197 = sphi 0, %s196
      %s213 = sphi 0, %s197
      %s219 = sphi 0, %s221
      %s222 = sphi 0, %s219
      %s223 = sphi 0, %s222
      %s239 = sphi 0, %s223
      %s245 = sphi 0, %s247
      %s248 = sphi 0, %s245
      %s249 = sphi 0, %s248
      %s265 = sphi 0, %s249
      %s271 = sphi 0, %s273
      %s274 = sphi 0, %s271
      %s275 = sphi 0, %s274
      %s291 = sphi 0, %s275
      %s297 = sphi 0, %s299
      %s300 = sphi 0, %s297
      %s301 = sphi 0, %s300
      %s317 = sphi 0, %s301
      %s323 = sphi 0, %s325
      %s326 = sphi 0, %s323
      %s327 = sphi 0, %s326
      %s343 = sphi 0, %s327
      %s349 = sphi 0, %s351
      %s352 = sphi 0, %s349
      %s353 = sphi 0, %s352
      %s369 = sphi 0, %s353
      %s375 = sphi 0, %s377
      %s378 = sphi 0, %s375
      %s379 = sphi 0, %s378
      %s395 = sphi 0, %s379
      %s401 = sphi 0, %s403
      %s404 = sphi 0, %s401
      %s405 = sphi 0, %s404
      %s421 = sphi 0, %s405
      %s427 = sphi 0, %s429
      %s430 = sphi 0, %s427
      %s431 = sphi 0, %s430
      %s447 = sphi 0, %s431
      %s453 = sphi 0, %s455
      %s456 = sphi 0, %s453
      %s457 = sphi 0, %s456
      %s473 = sphi 0, %s457
    $region4: #{text_encoder_forward.1} parent=1 // loop_header_branch
      %28 = sbr.rel (%p26) target = $region8
    $region5: #{text_encoder_forward.1} parent=1 // loop_body
      %s30 = ssub.s32 %s25, 1
      %s31 = ssub.s32 %s25, 2
      %s38 = sadd.s32 1, %s33
      %p39 = scmp.ge.s32.totalorder %s38, 2
      %s40 = scalar_select %p39, 0, %s38
      %s41 = sadd.s32 1, %s32
      %s42 = scalar_select %p39, %s41, %s32
      %p43 = scmp.ge.s32.totalorder %s42, 2
      %s44 = scalar_select %p43, 0, %s42
      %s45 = ssub.s32 %s32, %s44
      %p46 = scmp.eq.s32.totalorder %s45, 0
      %s48 = sadd.s32 %s47, 1
      %s49 = scalar_select %p46, %s47, %s48
      %p52 = pneg %p46
      %p53 = scmp.eq.s32.totalorder %s25, 3
      %p54 = por %p52, %p53
      %p55 = scmp.ne.s32.totalorder %s47, %s50
      %p56 = scmp.eq.s32.totalorder %s25, 0
      %p57 = por %p55, %p56
      %p58 = scmp.ne.s32.totalorder %s47, %s50
      %p59 = scmp.eq.s32.totalorder %s30, 3
      %p60 = por %p58, %p59
      %p61 = scmp.ne.s32.totalorder %s50, %s51
      %p62 = scmp.eq.s32.totalorder %s30, 0
      %p63 = por %p61, %p62
      %p64 = scmp.ne.s32.totalorder %s50, %s51
      %p65 = scmp.eq.s32.totalorder %s31, 3
      %p66 = por %p64, %p65
      %p68 = scmp.ne.s32.totalorder %s51, %s67
      %p69 = scmp.eq.s32.totalorder %s31, 0
      %p70 = por %p68, %p69
      %s71 = ssub.s32 %s32, %s44
      %p72 = scmp.eq.s32.totalorder %s71, 0
      %s74 = sadd.s32 %s73, 1
      %s75 = scalar_select %p72, %s73, %s74
      %p78 = pneg %p72
      %p79 = scmp.eq.s32.totalorder %s25, 3
      %p80 = por %p78, %p79
      %p81 = scmp.ne.s32.totalorder %s73, %s76
      %p82 = scmp.eq.s32.totalorder %s25, 0
      %p83 = por %p81, %p82
      %p84 = scmp.ne.s32.totalorder %s73, %s76
      %p85 = scmp.eq.s32.totalorder %s30, 3
      %p86 = por %p84, %p85
      %p87 = scmp.ne.s32.totalorder %s76, %s77
      %p88 = scmp.eq.s32.totalorder %s30, 0
      %p89 = por %p87, %p88
      %p90 = scmp.ne.s32.totalorder %s76, %s77
      %p91 = scmp.eq.s32.totalorder %s31, 3
      %p92 = por %p90, %p91
      %p94 = scmp.ne.s32.totalorder %s77, %s93
      %p95 = scmp.eq.s32.totalorder %s31, 0
      %p96 = por %p94, %p95
      %s98 = sadd.s32 %s97, 1
      %p101 = scmp.eq.s32.totalorder %s25, 3
      %p102 = scmp.ne.s32.totalorder %s97, %s99
      %p103 = scmp.eq.s32.totalorder %s25, 0
      %p104 = por %p102, %p103
      %p105 = scmp.ne.s32.totalorder %s97, %s99
      %p106 = scmp.eq.s32.totalorder %s30, 3
      %p107 = por %p105, %p106
      %p108 = scmp.ne.s32.totalorder %s99, %s100
      %p109 = scmp.eq.s32.totalorder %s30, 0
      %p110 = por %p108, %p109
      %p111 = scmp.ne.s32.totalorder %s99, %s100
      %p112 = scmp.eq.s32.totalorder %s31, 3
      %p113 = por %p111, %p112
      %p115 = scmp.ne.s32.totalorder %s100, %s114
      %p116 = scmp.eq.s32.totalorder %s31, 0
      %p117 = por %p115, %p116
      %s119 = sadd.s32 %s118, 1
      %p122 = scmp.eq.s32.totalorder %s25, 3
      %p123 = scmp.ne.s32.totalorder %s118, %s120
      %p124 = scmp.eq.s32.totalorder %s25, 0
      %p125 = por %p123, %p124
      %p126 = scmp.ne.s32.totalorder %s118, %s120
      %p127 = scmp.eq.s32.totalorder %s30, 3
      %p128 = por %p126, %p127
      %p129 = scmp.ne.s32.totalorder %s120, %s121
      %p130 = scmp.eq.s32.totalorder %s30, 0
      %p131 = por %p129, %p130
      %p132 = scmp.ne.s32.totalorder %s120, %s121
      %p133 = scmp.eq.s32.totalorder %s31, 3
      %p134 = por %p132, %p133
      %p136 = scmp.ne.s32.totalorder %s121, %s135
      %p137 = scmp.eq.s32.totalorder %s31, 0
      %p138 = por %p136, %p137
      %s139 = ssub.s32 %s33, %s40
      %p140 = scmp.eq.s32.totalorder %s139, 0
      %s142 = sadd.s32 %s141, 1
      %s143 = scalar_select %p140, %s141, %s142
      %p146 = pneg %p140
      %p147 = scmp.eq.s32.totalorder %s25, 3
      %p148 = por %p146, %p147
      %p149 = scmp.ne.s32.totalorder %s141, %s144
      %p150 = scmp.eq.s32.totalorder %s25, 0
      %p151 = por %p149, %p150
      %p152 = scmp.ne.s32.totalorder %s141, %s144
      %p153 = scmp.eq.s32.totalorder %s30, 3
      %p154 = por %p152, %p153
      %p155 = scmp.ne.s32.totalorder %s144, %s145
      %p156 = scmp.eq.s32.totalorder %s30, 0
      %p157 = por %p155, %p156
      %p158 = scmp.ne.s32.totalorder %s144, %s145
      %p159 = scmp.eq.s32.totalorder %s31, 3
      %p160 = por %p158, %p159
      %p162 = scmp.ne.s32.totalorder %s145, %s161
      %p163 = scmp.eq.s32.totalorder %s31, 0
      %p164 = por %p162, %p163
      %s165 = ssub.s32 %s33, %s40
      %p166 = scmp.eq.s32.totalorder %s165, 0
      %s168 = sadd.s32 %s167, 1
      %s169 = scalar_select %p166, %s167, %s168
      %p172 = pneg %p166
      %p173 = scmp.eq.s32.totalorder %s25, 3
      %p174 = por %p172, %p173
      %p175 = scmp.ne.s32.totalorder %s167, %s170
      %p176 = scmp.eq.s32.totalorder %s25, 0
      %p177 = por %p175, %p176
      %p178 = scmp.ne.s32.totalorder %s167, %s170
      %p179 = scmp.eq.s32.totalorder %s30, 3
      %p180 = por %p178, %p179
      %p181 = scmp.ne.s32.totalorder %s170, %s171
      %p182 = scmp.eq.s32.totalorder %s30, 0
      %p183 = por %p181, %p182
      %p184 = scmp.ne.s32.totalorder %s170, %s171
      %p185 = scmp.eq.s32.totalorder %s31, 3
      %p186 = por %p184, %p185
      %p188 = scmp.ne.s32.totalorder %s171, %s187
      %p189 = scmp.eq.s32.totalorder %s31, 0
      %p190 = por %p188, %p189
      %s191 = ssub.s32 %s33, %s40
      %p192 = scmp.eq.s32.totalorder %s191, 0
      %s194 = sadd.s32 %s193, 1
      %s195 = scalar_select %p192, %s193, %s194
      %p198 = pneg %p192
      %p199 = scmp.eq.s32.totalorder %s25, 3
      %p200 = por %p198, %p199
      %p201 = scmp.ne.s32.totalorder %s193, %s196
      %p202 = scmp.eq.s32.totalorder %s25, 0
      %p203 = por %p201, %p202
      %p204 = scmp.ne.s32.totalorder %s193, %s196
      %p205 = scmp.eq.s32.totalorder %s30, 3
      %p206 = por %p204, %p205
      %p207 = scmp.ne.s32.totalorder %s196, %s197
      %p208 = scmp.eq.s32.totalorder %s30, 0
      %p209 = por %p207, %p208
      %p210 = scmp.ne.s32.totalorder %s196, %s197
      %p211 = scmp.eq.s32.totalorder %s31, 3
      %p212 = por %p210, %p211
      %p214 = scmp.ne.s32.totalorder %s197, %s213
      %p215 = scmp.eq.s32.totalorder %s31, 0
      %p216 = por %p214, %p215
      %s217 = ssub.s32 %s33, %s40
      %p218 = scmp.eq.s32.totalorder %s217, 0
      %s220 = sadd.s32 %s219, 1
      %s221 = scalar_select %p218, %s219, %s220
      %p224 = pneg %p218
      %p225 = scmp.eq.s32.totalorder %s25, 3
      %p226 = por %p224, %p225
      %p227 = scmp.ne.s32.totalorder %s219, %s222
      %p228 = scmp.eq.s32.totalorder %s25, 0
      %p229 = por %p227, %p228
      %p230 = scmp.ne.s32.totalorder %s219, %s222
      %p231 = scmp.eq.s32.totalorder %s30, 3
      %p232 = por %p230, %p231
      %p233 = scmp.ne.s32.totalorder %s222, %s223
      %p234 = scmp.eq.s32.totalorder %s30, 0
      %p235 = por %p233, %p234
      %p236 = scmp.ne.s32.totalorder %s222, %s223
      %p237 = scmp.eq.s32.totalorder %s31, 3
      %p238 = por %p236, %p237
      %p240 = scmp.ne.s32.totalorder %s223, %s239
      %p241 = scmp.eq.s32.totalorder %s31, 0
      %p242 = por %p240, %p241
      %s243 = ssub.s32 %s33, %s40
      %p244 = scmp.eq.s32.totalorder %s243, 0
      %s246 = sadd.s32 %s245, 1
      %s247 = scalar_select %p244, %s245, %s246
      %p250 = pneg %p244
      %p251 = scmp.eq.s32.totalorder %s25, 3
      %p252 = por %p250, %p251
      %p253 = scmp.ne.s32.totalorder %s245, %s248
      %p254 = scmp.eq.s32.totalorder %s25, 0
      %p255 = por %p253, %p254
      %p256 = scmp.ne.s32.totalorder %s245, %s248
      %p257 = scmp.eq.s32.totalorder %s30, 3
      %p258 = por %p256, %p257
      %p259 = scmp.ne.s32.totalorder %s248, %s249
      %p260 = scmp.eq.s32.totalorder %s30, 0
      %p261 = por %p259, %p260
      %p262 = scmp.ne.s32.totalorder %s248, %s249
      %p263 = scmp.eq.s32.totalorder %s31, 3
      %p264 = por %p262, %p263
      %p266 = scmp.ne.s32.totalorder %s249, %s265
      %p267 = scmp.eq.s32.totalorder %s31, 0
      %p268 = por %p266, %p267
      %s269 = ssub.s32 %s33, %s40
      %p270 = scmp.eq.s32.totalorder %s269, 0
      %s272 = sadd.s32 %s271, 1
      %s273 = scalar_select %p270, %s271, %s272
      %p276 = pneg %p270
      %p277 = scmp.eq.s32.totalorder %s25, 3
      %p278 = por %p276, %p277
      %p279 = scmp.ne.s32.totalorder %s271, %s274
      %p280 = scmp.eq.s32.totalorder %s25, 0
      %p281 = por %p279, %p280
      %p282 = scmp.ne.s32.totalorder %s271, %s274
      %p283 = scmp.eq.s32.totalorder %s30, 3
      %p284 = por %p282, %p283
      %p285 = scmp.ne.s32.totalorder %s274, %s275
      %p286 = scmp.eq.s32.totalorder %s30, 0
      %p287 = por %p285, %p286
      %p288 = scmp.ne.s32.totalorder %s274, %s275
      %p289 = scmp.eq.s32.totalorder %s31, 3
      %p290 = por %p288, %p289
      %p292 = scmp.ne.s32.totalorder %s275, %s291
      %p293 = scmp.eq.s32.totalorder %s31, 0
      %p294 = por %p292, %p293
      %s295 = ssub.s32 %s33, %s40
      %p296 = scmp.eq.s32.totalorder %s295, 0
      %s298 = sadd.s32 %s297, 1
      %s299 = scalar_select %p296, %s297, %s298
      %p302 = pneg %p296
      %p303 = scmp.eq.s32.totalorder %s25, 3
      %p304 = por %p302, %p303
      %p305 = scmp.ne.s32.totalorder %s297, %s300
      %p306 = scmp.eq.s32.totalorder %s25, 0
      %p307 = por %p305, %p306
      %p308 = scmp.ne.s32.totalorder %s297, %s300
      %p309 = scmp.eq.s32.totalorder %s30, 3
      %p310 = por %p308, %p309
      %p311 = scmp.ne.s32.totalorder %s300, %s301
      %p312 = scmp.eq.s32.totalorder %s30, 0
      %p313 = por %p311, %p312
      %p314 = scmp.ne.s32.totalorder %s300, %s301
      %p315 = scmp.eq.s32.totalorder %s31, 3
      %p316 = por %p314, %p315
      %p318 = scmp.ne.s32.totalorder %s301, %s317
      %p319 = scmp.eq.s32.totalorder %s31, 0
      %p320 = por %p318, %p319
      %s321 = ssub.s32 %s33, %s40
      %p322 = scmp.eq.s32.totalorder %s321, 0
      %s324 = sadd.s32 %s323, 1
      %s325 = scalar_select %p322, %s323, %s324
      %p328 = pneg %p322
      %p329 = scmp.eq.s32.totalorder %s25, 3
      %p330 = por %p328, %p329
      %p331 = scmp.ne.s32.totalorder %s323, %s326
      %p332 = scmp.eq.s32.totalorder %s25, 0
      %p333 = por %p331, %p332
      %p334 = scmp.ne.s32.totalorder %s323, %s326
      %p335 = scmp.eq.s32.totalorder %s30, 3
      %p336 = por %p334, %p335
      %p337 = scmp.ne.s32.totalorder %s326, %s327
      %p338 = scmp.eq.s32.totalorder %s30, 0
      %p339 = por %p337, %p338
      %p340 = scmp.ne.s32.totalorder %s326, %s327
      %p341 = scmp.eq.s32.totalorder %s31, 3
      %p342 = por %p340, %p341
      %p344 = scmp.ne.s32.totalorder %s327, %s343
      %p345 = scmp.eq.s32.totalorder %s31, 0
      %p346 = por %p344, %p345
      %s347 = ssub.s32 %s33, %s40
      %p348 = scmp.eq.s32.totalorder %s347, 0
      %s350 = sadd.s32 %s349, 1
      %s351 = scalar_select %p348, %s349, %s350
      %p354 = pneg %p348
      %p355 = scmp.eq.s32.totalorder %s25, 3
      %p356 = por %p354, %p355
      %p357 = scmp.ne.s32.totalorder %s349, %s352
      %p358 = scmp.eq.s32.totalorder %s25, 0
      %p359 = por %p357, %p358
      %p360 = scmp.ne.s32.totalorder %s349, %s352
      %p361 = scmp.eq.s32.totalorder %s30, 3
      %p362 = por %p360, %p361
      %p363 = scmp.ne.s32.totalorder %s352, %s353
      %p364 = scmp.eq.s32.totalorder %s30, 0
      %p365 = por %p363, %p364
      %p366 = scmp.ne.s32.totalorder %s352, %s353
      %p367 = scmp.eq.s32.totalorder %s31, 3
      %p368 = por %p366, %p367
      %p370 = scmp.ne.s32.totalorder %s353, %s369
      %p371 = scmp.eq.s32.totalorder %s31, 0
      %p372 = por %p370, %p371
      %s373 = ssub.s32 %s33, %s40
      %p374 = scmp.eq.s32.totalorder %s373, 0
      %s376 = sadd.s32 %s375, 1
      %s377 = scalar_select %p374, %s375, %s376
      %p380 = pneg %p374
      %p381 = scmp.eq.s32.totalorder %s25, 3
      %p382 = por %p380, %p381
      %p383 = scmp.ne.s32.totalorder %s375, %s378
      %p384 = scmp.eq.s32.totalorder %s25, 0
      %p385 = por %p383, %p384
      %p386 = scmp.ne.s32.totalorder %s375, %s378
      %p387 = scmp.eq.s32.totalorder %s30, 3
      %p388 = por %p386, %p387
      %p389 = scmp.ne.s32.totalorder %s378, %s379
      %p390 = scmp.eq.s32.totalorder %s30, 0
      %p391 = por %p389, %p390
      %p392 = scmp.ne.s32.totalorder %s378, %s379
      %p393 = scmp.eq.s32.totalorder %s31, 3
      %p394 = por %p392, %p393
      %p396 = scmp.ne.s32.totalorder %s379, %s395
      %p397 = scmp.eq.s32.totalorder %s31, 0
      %p398 = por %p396, %p397
      %s399 = ssub.s32 %s33, %s40
      %p400 = scmp.eq.s32.totalorder %s399, 0
      %s402 = sadd.s32 %s401, 1
      %s403 = scalar_select %p400, %s401, %s402
      %p406 = pneg %p400
      %p407 = scmp.eq.s32.totalorder %s25, 3
      %p408 = por %p406, %p407
      %p409 = scmp.ne.s32.totalorder %s401, %s404
      %p410 = scmp.eq.s32.totalorder %s25, 0
      %p411 = por %p409, %p410
      %p412 = scmp.ne.s32.totalorder %s401, %s404
      %p413 = scmp.eq.s32.totalorder %s30, 3
      %p414 = por %p412, %p413
      %p415 = scmp.ne.s32.totalorder %s404, %s405
      %p416 = scmp.eq.s32.totalorder %s30, 0
      %p417 = por %p415, %p416
      %p418 = scmp.ne.s32.totalorder %s404, %s405
      %p419 = scmp.eq.s32.totalorder %s31, 3
      %p420 = por %p418, %p419
      %p422 = scmp.ne.s32.totalorder %s405, %s421
      %p423 = scmp.eq.s32.totalorder %s31, 0
      %p424 = por %p422, %p423
      %s425 = ssub.s32 %s33, %s40
      %p426 = scmp.eq.s32.totalorder %s425, 0
      %s428 = sadd.s32 %s427, 1
      %s429 = scalar_select %p426, %s427, %s428
      %p432 = pneg %p426
      %p433 = scmp.eq.s32.totalorder %s25, 3
      %p434 = por %p432, %p433
      %p435 = scmp.ne.s32.totalorder %s427, %s430
      %p436 = scmp.eq.s32.totalorder %s25, 0
      %p437 = por %p435, %p436
      %p438 = scmp.ne.s32.totalorder %s427, %s430
      %p439 = scmp.eq.s32.totalorder %s30, 3
      %p440 = por %p438, %p439
      %p441 = scmp.ne.s32.totalorder %s430, %s431
      %p442 = scmp.eq.s32.totalorder %s30, 0
      %p443 = por %p441, %p442
      %p444 = scmp.ne.s32.totalorder %s430, %s431
      %p445 = scmp.eq.s32.totalorder %s31, 3
      %p446 = por %p444, %p445
      %p448 = scmp.ne.s32.totalorder %s431, %s447
      %p449 = scmp.eq.s32.totalorder %s31, 0
      %p450 = por %p448, %p449
      %s451 = ssub.s32 %s32, %s44
      %p452 = scmp.eq.s32.totalorder %s451, 0
      %s454 = sadd.s32 %s453, 1
      %s455 = scalar_select %p452, %s453, %s454
      %p458 = pneg %p452
      %p459 = scmp.eq.s32.totalorder %s25, 3
      %p460 = por %p458, %p459
      %p461 = scmp.ne.s32.totalorder %s453, %s456
      %p462 = scmp.eq.s32.totalorder %s25, 0
      %p463 = por %p461, %p462
      %p464 = scmp.ne.s32.totalorder %s453, %s456
      %p465 = scmp.eq.s32.totalorder %s30, 3
      %p466 = por %p464, %p465
      %p467 = scmp.ne.s32.totalorder %s456, %s457
      %p468 = scmp.eq.s32.totalorder %s30, 0
      %p469 = por %p467, %p468
      %p470 = scmp.ne.s32.totalorder %s456, %s457
      %p471 = scmp.eq.s32.totalorder %s31, 3
      %p472 = por %p470, %p471
      %p474 = scmp.ne.s32.totalorder %s457, %s473
      %p475 = scmp.eq.s32.totalorder %s31, 0
      %p476 = por %p474, %p475
      %p477 = scmp.le.s32.totalorder 1, %s25
      %p478 = scmp.lt.s32.totalorder %s25, 5
      %p479 = pnand %p477, %p478
      %p480 = pneg %p479
      // Predicated region
      $region9: #{text_encoder_forward.1} parent=5 // pred_check
        _
      $region10: #{text_encoder_forward.1} parent=5 // pred_check_branch
        %482 = sbr.rel (%p479) target = $region12
      $region11: #{text_encoder_forward.1} parent=5 // pred_region
        %s483 = ssub.s32 %s25, 1
        // Predicated region
        $region13: #{text_encoder_forward.1} parent=11 // pred_check
          %p484 = pneg %p110
        $region14: #{text_encoder_forward.1} parent=11 // pred_check_branch
          %486 = sbr.rel (%p484) target = $region16
        $region15: #{text_encoder_forward.1} parent=11 // pred_region
          _
        $region16: #{text_encoder_forward.1} parent=11 // pred_fallthru
          _
        // Predicated region
        $region17: #{text_encoder_forward.1} parent=11 // pred_check
          %p487 = pneg %p131
        $region18: #{text_encoder_forward.1} parent=11 // pred_check_branch
          %489 = sbr.rel (%p487) target = $region20
        $region19: #{text_encoder_forward.1} parent=11 // pred_region
          _
        $region20: #{text_encoder_forward.1} parent=11 // pred_fallthru
          _
      $region12: #{text_encoder_forward.1} parent=5 // pred_fallthru
        _
      %p490 = scmp.lt.s32.totalorder %s25, 4
      // Predicated region
      $region21: #{text_encoder_forward.1} parent=5 // pred_check
        %p491 = pneg %p490
      $region22: #{text_encoder_forward.1} parent=5 // pred_check_branch
        %493 = sbr.rel (%p491) target = $region24
      $region23: #{text_encoder_forward.1} parent=5 // pred_region
        // Predicated region
        $region25: #{text_encoder_forward.1} parent=23 // pred_check
          %p494 = pneg %p57
        $region26: #{text_encoder_forward.1} parent=23 // pred_check_branch
          %496 = sbr.rel (%p494) target = $region28
        $region27: #{text_encoder_forward.1} parent=23 // pred_region
          %p497 = scmp.lt.s32.totalorder %s32, 1
          %s498 = scalar_select %p497, %s32, 1
          %s499 = smul.addr %s498, 8
          %s500 = scalar_lea.vmem %s0, %s499
        $region28: #{text_encoder_forward.1} parent=23 // pred_fallthru
          _
        // Predicated region
        $region29: #{text_encoder_forward.1} parent=23 // pred_check
          %p501 = pneg %p83
        $region30: #{text_encoder_forward.1} parent=23 // pred_check_branch
          %503 = sbr.rel (%p501) target = $region32
        $region31: #{text_encoder_forward.1} parent=23 // pred_region
          %p504 = scmp.lt.s32.totalorder %s32, 1
          %s505 = scalar_select %p504, %s32, 1
          %s506 = scalar_lea.vmem %s1, %s505
        $region32: #{text_encoder_forward.1} parent=23 // pred_fallthru
          _
        // Predicated region
        $region33: #{text_encoder_forward.1} parent=23 // pred_check
          %p507 = pneg %p151
        $region34: #{text_encoder_forward.1} parent=23 // pred_check_branch
          %509 = sbr.rel (%p507) target = $region36
        $region35: #{text_encoder_forward.1} parent=23 // pred_region
          %p510 = scmp.lt.s32.totalorder %s33, 1
          %s511 = scalar_select %p510, %s33, 1
          %s512 = smul.addr %s511, 4
          %s513 = smul.addr %s512, 4
          %s514 = scalar_lea.vmem %s4, %s513
        $region36: #{text_encoder_forward.1} parent=23 // pred_fallthru
          _
        // Predicated region
        $region37: #{text_encoder_forward.1} parent=23 // pred_check
          %p515 = pneg %p177
        $region38: #{text_encoder_forward.1} parent=23 // pred_check_branch
          %517 = sbr.rel (%p515) target = $region40
        $region39: #{text_encoder_forward.1} parent=23 // pred_region
          %p518 = scmp.lt.s32.totalorder %s33, 1
          %s519 = scalar_select %p518, %s33, 1
          %s520 = scalar_lea.vmem %s5, %s519
        $region40: #{text_encoder_forward.1} parent=23 // pred_fallthru
          _
        // Predicated region
        $region41: #{text_encoder_forward.1} parent=23 // pred_check
          %p521 = pneg %p203
        $region42: #{text_encoder_forward.1} parent=23 // pred_check_branch
          %523 = sbr.rel (%p521) target = $region44
        $region43: #{text_encoder_forward.1} parent=23 // pred_region
          %p524 = scmp.lt.s32.totalorder %s33, 1
          %s525 = scalar_select %p524, %s33, 1
          %s526 = smul.addr %s525, 4
          %s527 = smul.addr %s526, 4
          %s528 = scalar_lea.vmem %s6, %s527
        $region44: #{text_encoder_forward.1} parent=23 // pred_fallthru
          _
        // Predicated region
        $region45: #{text_encoder_forward.1} parent=23 // pred_check
          %p529 = pneg %p229
        $region46: #{text_encoder_forward.1} parent=23 // pred_check_branch
          %531 = sbr.rel (%p529) target = $region48
        $region47: #{text_encoder_forward.1} parent=23 // pred_region
          %p532 = scmp.lt.s32.totalorder %s33, 1
          %s533 = scalar_select %p532, %s33, 1
          %s534 = scalar_lea.vmem %s7, %s533
        $region48: #{text_encoder_forward.1} parent=23 // pred_fallthru
          _
        // Predicated region
        $region49: #{text_encoder_forward.1} parent=23 // pred_check
          %p535 = pneg %p255
        $region50: #{text_encoder_forward.1} parent=23 // pred_check_branch
          %537 = sbr.rel (%p535) target = $region52
        $region51: #{text_encoder_forward.1} parent=23 // pred_region
          %p538 = scmp.lt.s32.totalorder %s33, 1
          %s539 = scalar_select %p538, %s33, 1
          %s540 = scalar_lea.vmem %s8, %s539
        $region52: #{text_encoder_forward.1} parent=23 // pred_fallthru
          _
        // Predicated region
        $region53: #{text_encoder_forward.1} parent=23 // pred_check
          %p541 = pneg %p281
        $region54: #{text_encoder_forward.1} parent=23 // pred_check_branch
          %543 = sbr.rel (%p541) target = $region56
        $region55: #{text_encoder_forward.1} parent=23 // pred_region
          %p544 = scmp.lt.s32.totalorder %s33, 1
          %s545 = scalar_select %p544, %s33, 1
          %s546 = scalar_lea.vmem %s9, %s545
        $region56: #{text_encoder_forward.1} parent=23 // pred_fallthru
          _
        // Predicated region
        $region57: #{text_encoder_forward.1} parent=23 // pred_check
          %p547 = pneg %p307
        $region58: #{text_encoder_forward.1} parent=23 // pred_check_branch
          %549 = sbr.rel (%p547) target = $region60
        $region59: #{text_encoder_forward.1} parent=23 // pred_region
          %p550 = scmp.lt.s32.totalorder %s33, 1
          %s551 = scalar_select %p550, %s33, 1
          %s552 = smul.addr %s551, 4
          %s553 = smul.addr %s552, 4
          %s554 = scalar_lea.vmem %s10, %s553
        $region60: #{text_encoder_forward.1} parent=23 // pred_fallthru
          _
        // Predicated region
        $region61: #{text_encoder_forward.1} parent=23 // pred_check
          %p555 = pneg %p333
        $region62: #{text_encoder_forward.1} parent=23 // pred_check_branch
          %557 = sbr.rel (%p555) target = $region64
        $region63: #{text_encoder_forward.1} parent=23 // pred_region
          %p558 = scmp.lt.s32.totalorder %s33, 1
          %s559 = scalar_select %p558, %s33, 1
          %s560 = scalar_lea.vmem %s11, %s559
        $region64: #{text_encoder_forward.1} parent=23 // pred_fallthru
          _
        // Predicated region
        $region65: #{text_encoder_forward.1} parent=23 // pred_check
          %p561 = pneg %p359
        $region66: #{text_encoder_forward.1} parent=23 // pred_check_branch
          %563 = sbr.rel (%p561) target = $region68
        $region67: #{text_encoder_forward.1} parent=23 // pred_region
          %p564 = scmp.lt.s32.totalorder %s33, 1
          %s565 = scalar_select %p564, %s33, 1
          %s566 = smul.addr %s565, 8
          %s567 = smul.addr %s566, 4
          %s568 = scalar_lea.vmem %s12, %s567
        $region68: #{text_encoder_forward.1} parent=23 // pred_fallthru
          _
        // Predicated region
        $region69: #{text_encoder_forward.1} parent=23 // pred_check
          %p569 = pneg %p385
        $region70: #{text_encoder_forward.1} parent=23 // pred_check_branch
          %571 = sbr.rel (%p569) target = $region72
        $region71: #{text_encoder_forward.1} parent=23 // pred_region
          %p572 = scmp.lt.s32.totalorder %s33, 1
          %s573 = scalar_select %p572, %s33, 1
          %s574 = scalar_lea.vmem %s13, %s573
        $region72: #{text_encoder_forward.1} parent=23 // pred_fallthru
          _
        // Predicated region
        $region73: #{text_encoder_forward.1} parent=23 // pred_check
          %p575 = pneg %p411
        $region74: #{text_encoder_forward.1} parent=23 // pred_check_branch
          %577 = sbr.rel (%p575) target = $region76
        $region75: #{text_encoder_forward.1} parent=23 // pred_region
          %p578 = scmp.lt.s32.totalorder %s33, 1
          %s579 = scalar_select %p578, %s33, 1
          %s580 = scalar_lea.vmem %s14, %s579
        $region76: #{text_encoder_forward.1} parent=23 // pred_fallthru
          _
        // Predicated region
        $region77: #{text_encoder_forward.1} parent=23 // pred_check
          %p581 = pneg %p437
        $region78: #{text_encoder_forward.1} parent=23 // pred_check_branch
          %583 = sbr.rel (%p581) target = $region80
        $region79: #{text_encoder_forward.1} parent=23 // pred_region
          %p584 = scmp.lt.s32.totalorder %s33, 1
          %s585 = scalar_select %p584, %s33, 1
          %s586 = scalar_lea.vmem %s15, %s585
        $region80: #{text_encoder_forward.1} parent=23 // pred_fallthru
          _
      $region24: #{text_encoder_forward.1} parent=5 // pred_fallthru
        _
      %p587 = scmp.le.s32.totalorder 1, %s25
      %p588 = scmp.lt.s32.totalorder %s25, 5
      %p589 = pnand %p587, %p588
      %p590 = pneg %p589
      // Predicated region
      $region81: #{text_encoder_forward.1} parent=5 // pred_check
        _
      $region82: #{text_encoder_forward.1} parent=5 // pred_check_branch
        %592 = sbr.rel (%p589) target = $region84
      $region83: #{text_encoder_forward.1} parent=5 // pred_region
        %s593 = ssub.s32 %s25, 1
        %p594 = scmp.lt.s32.totalorder %s34, 1
        %s595 = scalar_select %p594, %s34, 1
        %s596 = smul.addr %s595, 8
        %s597 = scalar_lea.vmem %s0, %s596
        %p598 = pneg %p63
        %p599 = pneg %p60
        %p600 = scmp.lt.s32.totalorder %s34, 1
        %s601 = scalar_select %p600, %s34, 1
        %s602 = scalar_lea.vmem %s1, %s601
        %p603 = pneg %p89
        %p604 = pneg %p86
        %p605 = pneg %p110
        %p606 = pneg %p107
        %p607 = pneg %p131
        %p608 = pneg %p128
        %p609 = scmp.lt.s32.totalorder %s35, 1
        %s610 = scalar_select %p609, %s35, 1
        %s611 = smul.addr %s610, 4
        %s612 = smul.addr %s611, 4
        %s613 = scalar_lea.vmem %s4, %s612
        %p614 = pneg %p157
        %p615 = pneg %p154
        %p616 = scmp.lt.s32.totalorder %s35, 1
        %s617 = scalar_select %p616, %s35, 1
        %s618 = scalar_lea.vmem %s5, %s617
        %p619 = pneg %p183
        %p620 = pneg %p180
        %p621 = scmp.lt.s32.totalorder %s35, 1
        %s622 = scalar_select %p621, %s35, 1
        %s623 = smul.addr %s622, 4
        %s624 = smul.addr %s623, 4
        %s625 = scalar_lea.vmem %s6, %s624
        %p626 = pneg %p209
        %p627 = pneg %p206
        %p628 = scmp.lt.s32.totalorder %s35, 1
        %s629 = scalar_select %p628, %s35, 1
        %s630 = scalar_lea.vmem %s7, %s629
        %p631 = pneg %p235
        %p632 = pneg %p232
        %p633 = scmp.lt.s32.totalorder %s35, 1
        %s634 = scalar_select %p633, %s35, 1
        %s635 = scalar_lea.vmem %s8, %s634
        %p636 = pneg %p261
        %p637 = pneg %p258
        %p638 = scmp.lt.s32.totalorder %s35, 1
        %s639 = scalar_select %p638, %s35, 1
        %s640 = scalar_lea.vmem %s9, %s639
        %p641 = pneg %p287
        %p642 = pneg %p284
        %p643 = scmp.lt.s32.totalorder %s35, 1
        %s644 = scalar_select %p643, %s35, 1
        %s645 = smul.addr %s644, 4
        %s646 = smul.addr %s645, 4
        %s647 = scalar_lea.vmem %s10, %s646
        %p648 = pneg %p313
        %p649 = pneg %p310
        %p650 = scmp.lt.s32.totalorder %s35, 1
        %s651 = scalar_select %p650, %s35, 1
        %s652 = scalar_lea.vmem %s11, %s651
        %p653 = pneg %p339
        %p654 = pneg %p336
        %p655 = scmp.lt.s32.totalorder %s35, 1
        %s656 = scalar_select %p655, %s35, 1
        %s657 = smul.addr %s656, 8
        %s658 = smul.addr %s657, 4
        %s659 = scalar_lea.vmem %s12, %s658
        %p660 = pneg %p365
        %p661 = pneg %p362
        %p662 = scmp.lt.s32.totalorder %s35, 1
        %s663 = scalar_select %p662, %s35, 1
        %s664 = scalar_lea.vmem %s13, %s663
        %p665 = pneg %p391
        %p666 = pneg %p388
        %p667 = scmp.lt.s32.totalorder %s35, 1
        %s668 = scalar_select %p667, %s35, 1
        %s669 = scalar_lea.vmem %s14, %s668
        %p670 = pneg %p417
        %p671 = pneg %p414
        %p672 = scmp.lt.s32.totalorder %s35, 1
        %s673 = scalar_select %p672, %s35, 1
        %s674 = scalar_lea.vmem %s15, %s673
        %p675 = pneg %p443
        %p676 = pneg %p440
        %p677 = pneg %p469
        %p678 = pneg %p466
        %s679 = sand.u32 %s456, 1
        %s680 = scalar_lea.sflag [#allocation4], %s679
        %s681 = sand.u32 %s456, 1
        %s682 = smul.addr %s681, 8
        %s683 = scalar_lea.vmem [#allocation3], %s682
        %p684 = scmp.lt.s32.totalorder %s34, 1
        %s685 = scalar_select %p684, %s34, 1
        %s686 = smul.addr %s685, 8
        %s687 = scalar_lea.vmem %s0, %s686
        %p688 = scmp.lt.s32.totalorder %s34, 1
        %s689 = scalar_select %p688, %s34, 1
        %s690 = scalar_lea.vmem %s1, %s689
        %p691 = scmp.lt.s32.totalorder %s35, 1
        %s692 = scalar_select %p691, %s35, 1
        %s693 = smul.addr %s692, 4
        %s694 = smul.addr %s693, 4
        %s695 = scalar_lea.vmem %s4, %s694
        %p696 = scmp.lt.s32.totalorder %s35, 1
        %s697 = scalar_select %p696, %s35, 1
        %s698 = scalar_lea.vmem %s5, %s697
        %p699 = scmp.lt.s32.totalorder %s35, 1
        %s700 = scalar_select %p699, %s35, 1
        %s701 = smul.addr %s700, 4
        %s702 = smul.addr %s701, 4
        %s703 = scalar_lea.vmem %s6, %s702
        %p704 = scmp.lt.s32.totalorder %s35, 1
        %s705 = scalar_select %p704, %s35, 1
        %s706 = scalar_lea.vmem %s7, %s705
        %p707 = scmp.lt.s32.totalorder %s35, 1
        %s708 = scalar_select %p707, %s35, 1
        %s709 = scalar_lea.vmem %s8, %s708
        %p710 = scmp.lt.s32.totalorder %s35, 1
        %s711 = scalar_select %p710, %s35, 1
        %s712 = scalar_lea.vmem %s9, %s711
        %p713 = scmp.lt.s32.totalorder %s35, 1
        %s714 = scalar_select %p713, %s35, 1
        %s715 = smul.addr %s714, 4
        %s716 = smul.addr %s715, 4
        %s717 = scalar_lea.vmem %s10, %s716
        %p718 = scmp.lt.s32.totalorder %s35, 1
        %s719 = scalar_select %p718, %s35, 1
        %s720 = scalar_lea.vmem %s11, %s719
        %p721 = scmp.lt.s32.totalorder %s35, 1
        %s722 = scalar_select %p721, %s35, 1
        %s723 = smul.addr %s722, 8
        %s724 = smul.addr %s723, 4
        %s725 = scalar_lea.vmem %s12, %s724
        %p726 = scmp.lt.s32.totalorder %s35, 1
        %s727 = scalar_select %p726, %s35, 1
        %s728 = scalar_lea.vmem %s13, %s727
        %p729 = scmp.lt.s32.totalorder %s35, 1
        %s730 = scalar_select %p729, %s35, 1
        %s731 = scalar_lea.vmem %s14, %s730
        %p732 = scmp.lt.s32.totalorder %s35, 1
        %s733 = scalar_select %p732, %s35, 1
        %s734 = scalar_lea.vmem %s15, %s733
        %p736 = scmp.eq.s32.totalorder %s35, 0
        // Predicated region
        $region85: #{text_encoder_forward.1} parent=83 // pred_check
          %p737 = pneg %p736
        $region86: #{text_encoder_forward.1} parent=83 // pred_check_branch
          %739 = sbr.rel (%p737) target = $region88
        $region87: #{text_encoder_forward.1} parent=83 // pred_region
          %v740 = vld [vmem:[%s687] sm:$0xff]
          %v741 = vld [vmem:[%s2] sm:$0x1]
          %v742 = vld [vmem:[%s3] sm:$0x1]
          %vm743 = vcmask 261120
          %v744 = vsel %vm743, %v740, 0.0
          %745 = vadd.xlane.f32.xlu0 %v744
          %v746 = vpop.xlane.xlu0 %745
          %v747 = vrcp.pop 32.0
          %v748 = vmul.f32 %v746, %v747
          %v749 = vsub.f32 %v740, %v748
          %v750 = vmul.f32 %v749, %v749
          %v751 = vsel %vm743, %v750, 0.0
          %752 = vadd.xlane.f32.xlu0 %v751
          %v753 = vpop.xlane.xlu0 %752
          %v754 = vmul.f32 %v753, %v747
          %v755 = vadd.f32 %v754, 1e-05
          %v756 = vrsqrt.pop %v755
          %v757 = vmul.f32 %v749, %v756
          %v759 = vlaneseq
          %v760 = vshrl.u32 %v759, 7
          %v761 = vsub.s32 0, %v760
          %v762 = vrot.slane %v741, %v761
          %v764 = vmul.f32 %v757, %v762
          %v766 = vlaneseq
          %v767 = vshrl.u32 %v766, 7
          %v768 = vsub.s32 0, %v767
          %v769 = vrot.slane %v742, %v768
          %v771 = vadd.f32 %v764, %v769
          %772 = vst.msk [vmem:[#allocation2] sm:$0xff] %vm743, %v771
        $region88: #{text_encoder_forward.1} parent=83 // pred_fallthru
          _
        %v773 = vld [vmem:[#allocation2] sm:$0xff]
        %v774 = vpack.c.bf16 %v773, %v773
        %v775 = vld [vmem:[%s695] sm:$0xf]
        %v776 = vld [vmem:[%s695 + $0x4] sm:$0xf]
        %v777 = vld [vmem:[%s695 + $0x8] sm:$0xf]
        %v778 = vld [vmem:[%s695 + $0xc] sm:$0xf]
        %v779 = vld [vmem:[%s698] sm:$0x1]
        %v781 = vlaneseq
        %v782 = vshrl.u32 %v781, 7
        %v783 = vsub.s32 0, %v782
        %v784 = vrot.slane %v779, %v783
        %v790 = vunpack.c.l.b16 %v775
        %v791 = vunpack.c.l.b16 %v776
        %v792 = vunpack.c.l.b16 %v777
        %v793 = vunpack.c.l.b16 %v778
        %v794 = vpack.c.b16 %v791, %v790
        %v795 = vpack.c.b16 %v793, %v792
        %vm798 = vcmask 261120
        %v800 = vsel %vm798, %v774, 0
        %802 = vmatprep.subr.bf16.mxu0 0
        %803 = vmatpush1.bf16.msra.mxu0 %v794
        %804 = vmatprep.subr.bf16.mxu0 0
        %805 = vmatpush1.bf16.msra.mxu0 %v795
        %806 = vmatprep.subr.bf16.mxu0 0
        %807 = vmatpush1.bf16.msra.mxu0 0
        %808 = vmatprep.subr.bf16.mxu0 0
        %809 = vmatpush1.bf16.msra.mxu0 0
        %810 = vmatprep.subr.bf16.mxu0 0
        %811 = vmatpush1.bf16.msra.mxu0 0
        %812 = vmatprep.subr.bf16.mxu0 0
        %813 = vmatpush1.bf16.msra.mxu0 0
        %814 = vmatprep.subr.bf16.mxu0 0
        %815 = vmatpush1.bf16.msra.mxu0 0
        %816 = vmatprep.subr.bf16.mxu0 0
        %817 = vmatpush1.bf16.msra.mxu0 0
        %818 = vmatprep.subr.bf16.mxu0 0
        %819 = vmatpush1.bf16.msra.mxu0 0
        %820 = vmatprep.subr.bf16.mxu0 0
        %821 = vmatpush1.bf16.msra.mxu0 0
        %822 = vmatprep.subr.bf16.mxu0 0
        %823 = vmatpush1.bf16.msra.mxu0 0
        %824 = vmatprep.subr.bf16.mxu0 0
        %825 = vmatpush1.bf16.msra.mxu0 0
        %826 = vmatprep.subr.bf16.mxu0 0
        %827 = vmatpush1.bf16.msra.mxu0 0
        %828 = vmatprep.subr.bf16.mxu0 0
        %829 = vmatpush1.bf16.msra.mxu0 0
        %830 = vmatprep.subr.bf16.mxu0 0
        %831 = vmatpush1.bf16.msra.mxu0 0
        %832 = vmatprep.subr.bf16.mxu0 0
        %833 = vmatpush1.bf16.msra.mxu0 0
        %834 = vmatprep.mubr.bf16.mxu0 0
        %835 = vmatmul.mubr.bf16.gmra.mrb[0].mxu0 %v800
        %v836 = vpop.f32.mrb[0].mxu0
        %v837 = vadd.f32 %v784, %v836
        %v838 = vpop.f32.mrb[0].mxu0
        %v839 = vpop.f32.mrb[0].mxu0
        %v840 = vpop.f32.mrb[0].mxu0
        %841 = vdwg.mxu0
        %843 = vrot.lane.b32.xlu0 %v837, 120
        %v844 = vpop.permute.xlu0 %843
        %846 = vrot.lane.b32.xlu0 %v837, 112
        %v847 = vpop.permute.xlu0 %846
        %849 = vrot.lane.b32.xlu0 %v837, 104
        %v850 = vpop.permute.xlu0 %849
        %v852 = vpack.c.bf16 %v837, %v837
        %v853 = vpack.c.bf16 %v844, %v844
        %v854 = vpack.c.bf16 %v847, %v847
        %v855 = vpack.c.bf16 %v850, %v850
        %v856 = vld [vmem:[%s690] sm:$0x1]
        %v858 = vlaneseq
        %v859 = vshrl.u32 %v858, 7
        %v860 = vsub.s32 0, %v859
        %v861 = vrot.slane %v856, %v860
        %864 = vrot.lane.b32.xlu0 %v852, 96
        %v865 = vpop.permute.xlu0 %864
        %vm866 = vcmask 64512
        %v868 = vsel %vm866, %v852, 0
        %v871 = vsel %vm866, %v865, 0
        %873 = vmatprep.subr.bf16.mxu0 0
        %874 = vmatpush1.bf16.xpose.msra.mxu0 %v871
        %875 = vmatprep.subr.bf16.mxu0 0
        %876 = vmatpush1.bf16.xpose.msra.mxu0 0
        %877 = vmatprep.subr.bf16.mxu0 0
        %878 = vmatpush1.bf16.xpose.msra.mxu0 0
        %879 = vmatprep.subr.bf16.mxu0 0
        %880 = vmatpush1.bf16.xpose.msra.mxu0 0
        %881 = vmatprep.subr.bf16.mxu0 0
        %882 = vmatpush1.bf16.xpose.msra.mxu0 0
        %883 = vmatprep.subr.bf16.mxu0 0
        %884 = vmatpush1.bf16.xpose.msra.mxu0 0
        %885 = vmatprep.subr.bf16.mxu0 0
        %886 = vmatpush1.bf16.xpose.msra.mxu0 0
        %887 = vmatprep.subr.bf16.mxu0 0
        %888 = vmatpush1.bf16.xpose.msra.mxu0 0
        %889 = vmatprep.subr.bf16.mxu0 0
        %890 = vmatpush1.bf16.xpose.msra.mxu0 0
        %891 = vmatprep.subr.bf16.mxu0 0
        %892 = vmatpush1.bf16.xpose.msra.mxu0 0
        %893 = vmatprep.subr.bf16.mxu0 0
        %894 = vmatpush1.bf16.xpose.msra.mxu0 0
        %895 = vmatprep.subr.bf16.mxu0 0
        %896 = vmatpush1.bf16.xpose.msra.mxu0 0
        %897 = vmatprep.subr.bf16.mxu0 0
        %898 = vmatpush1.bf16.xpose.msra.mxu0 0
        %899 = vmatprep.subr.bf16.mxu0 0
        %900 = vmatpush1.bf16.xpose.msra.mxu0 0
        %901 = vmatprep.subr.bf16.mxu0 0
        %902 = vmatpush1.bf16.xpose.msra.mxu0 0
        %903 = vmatprep.subr.bf16.mxu0 0
        %904 = vmatpush1.bf16.xpose.msra.mxu0 0
        %905 = vmatprep.mubr.bf16.mxu0 0
        %906 = vmatmul.mubr.bf16.gmra.mrb[0].mxu0 %v868
        %v907 = vpop.f32.mrb[0].mxu0
        %v908 = vadd.f32 %v861, %v907
        %v909 = vpop.f32.mrb[0].mxu0
        %v910 = vpop.f32.mrb[0].mxu0
        %v911 = vpop.f32.mrb[0].mxu0
        %912 = vdwg.mxu0
        %914 = vrot.lane.b32.xlu0 %v853, 96
        %v915 = vpop.permute.xlu0 %914
        %v917 = vsel %vm866, %v853, 0
        %v920 = vsel %vm866, %v915, 0
        %922 = vmatprep.subr.bf16.mxu0 0
        %923 = vmatpush1.bf16.xpose.msra.mxu0 %v920
        %924 = vmatprep.subr.bf16.mxu0 0
        %925 = vmatpush1.bf16.xpose.msra.mxu0 0
        %926 = vmatprep.subr.bf16.mxu0 0
        %927 = vmatpush1.bf16.xpose.msra.mxu0 0
        %928 = vmatprep.subr.bf16.mxu0 0
        %929 = vmatpush1.bf16.xpose.msra.mxu0 0
        %930 = vmatprep.subr.bf16.mxu0 0
        %931 = vmatpush1.bf16.xpose.msra.mxu0 0
        %932 = vmatprep.subr.bf16.mxu0 0
        %933 = vmatpush1.bf16.xpose.msra.mxu0 0
        %934 = vmatprep.subr.bf16.mxu0 0
        %935 = vmatpush1.bf16.xpose.msra.mxu0 0
        %936 = vmatprep.subr.bf16.mxu0 0
        %937 = vmatpush1.bf16.xpose.msra.mxu0 0
        %938 = vmatprep.subr.bf16.mxu0 0
        %939 = vmatpush1.bf16.xpose.msra.mxu0 0
        %940 = vmatprep.subr.bf16.mxu0 0
        %941 = vmatpush1.bf16.xpose.msra.mxu0 0
        %942 = vmatprep.subr.bf16.mxu0 0
        %943 = vmatpush1.bf16.xpose.msra.mxu0 0
        %944 = vmatprep.subr.bf16.mxu0 0
        %945 = vmatpush1.bf16.xpose.msra.mxu0 0
        %946 = vmatprep.subr.bf16.mxu0 0
        %947 = vmatpush1.bf16.xpose.msra.mxu0 0
        %948 = vmatprep.subr.bf16.mxu0 0
        %949 = vmatpush1.bf16.xpose.msra.mxu0 0
        %950 = vmatprep.subr.bf16.mxu0 0
        %951 = vmatpush1.bf16.xpose.msra.mxu0 0
        %952 = vmatprep.subr.bf16.mxu0 0
        %953 = vmatpush1.bf16.xpose.msra.mxu0 0
        %954 = vmatprep.mubr.bf16.mxu0 0
        %955 = vmatmul.mubr.bf16.gmra.mrb[0].mxu0 %v917
        %v956 = vpop.f32.mrb[0].mxu0
        %v957 = vadd.f32 %v861, %v956
        %v958 = vpop.f32.mrb[0].mxu0
        %v959 = vpop.f32.mrb[0].mxu0
        %v960 = vpop.f32.mrb[0].mxu0
        %961 = vdwg.mxu0
        %963 = vrot.lane.b32.xlu0 %v854, 96
        %v964 = vpop.permute.xlu0 %963
        %v966 = vsel %vm866, %v854, 0
        %v969 = vsel %vm866, %v964, 0
        %971 = vmatprep.subr.bf16.mxu0 0
        %972 = vmatpush1.bf16.xpose.msra.mxu0 %v969
        %973 = vmatprep.subr.bf16.mxu0 0
        %974 = vmatpush1.bf16.xpose.msra.mxu0 0
        %975 = vmatprep.subr.bf16.mxu0 0
        %976 = vmatpush1.bf16.xpose.msra.mxu0 0
        %977 = vmatprep.subr.bf16.mxu0 0
        %978 = vmatpush1.bf16.xpose.msra.mxu0 0
        %979 = vmatprep.subr.bf16.mxu0 0
        %980 = vmatpush1.bf16.xpose.msra.mxu0 0
        %981 = vmatprep.subr.bf16.mxu0 0
        %982 = vmatpush1.bf16.xpose.msra.mxu0 0
        %983 = vmatprep.subr.bf16.mxu0 0
        %984 = vmatpush1.bf16.xpose.msra.mxu0 0
        %985 = vmatprep.subr.bf16.mxu0 0
        %986 = vmatpush1.bf16.xpose.msra.mxu0 0
        %987 = vmatprep.subr.bf16.mxu0 0
        %988 = vmatpush1.bf16.xpose.msra.mxu0 0
        %989 = vmatprep.subr.bf16.mxu0 0
        %990 = vmatpush1.bf16.xpose.msra.mxu0 0
        %991 = vmatprep.subr.bf16.mxu0 0
        %992 = vmatpush1.bf16.xpose.msra.mxu0 0
        %993 = vmatprep.subr.bf16.mxu0 0
        %994 = vmatpush1.bf16.xpose.msra.mxu0 0
        %995 = vmatprep.subr.bf16.mxu0 0
        %996 = vmatpush1.bf16.xpose.msra.mxu0 0
        %997 = vmatprep.subr.bf16.mxu0 0
        %998 = vmatpush1.bf16.xpose.msra.mxu0 0
        %999 = vmatprep.subr.bf16.mxu0 0
        %1000 = vmatpush1.bf16.xpose.msra.mxu0 0
        %1001 = vmatprep.subr.bf16.mxu0 0
        %1002 = vmatpush1.bf16.xpose.msra.mxu0 0
        %1003 = vmatprep.mubr.bf16.mxu0 0
        %1004 = vmatmul.mubr.bf16.gmra.mrb[0].mxu0 %v966
        %v1005 = vpop.f32.mrb[0].mxu0
        %v1006 = vadd.f32 %v861, %v1005
        %v1007 = vpop.f32.mrb[0].mxu0
        %v1008 = vpop.f32.mrb[0].mxu0
        %v1009 = vpop.f32.mrb[0].mxu0
        %1010 = vdwg.mxu0
        %1012 = vrot.lane.b32.xlu0 %v855, 96
        %v1013 = vpop.permute.xlu0 %1012
        %v1015 = vsel %vm866, %v855, 0
        %v1018 = vsel %vm866, %v1013, 0
        %1020 = vmatprep.subr.bf16.mxu0 0
        %1021 = vmatpush1.bf16.xpose.msra.mxu0 %v1018
        %1022 = vmatprep.subr.bf16.mxu0 0
        %1023 = vmatpush1.bf16.xpose.msra.mxu0 0
        %1024 = vmatprep.subr.bf16.mxu0 0
        %1025 = vmatpush1.bf16.xpose.msra.mxu0 0
        %1026 = vmatprep.subr.bf16.mxu0 0
        %1027 = vmatpush1.bf16.xpose.msra.mxu0 0
        %1028 = vmatprep.subr.bf16.mxu0 0
        %1029 = vmatpush1.bf16.xpose.msra.mxu0 0
        %1030 = vmatprep.subr.bf16.mxu0 0
        %1031 = vmatpush1.bf16.xpose.msra.mxu0 0
        %1032 = vmatprep.subr.bf16.mxu0 0
        %1033 = vmatpush1.bf16.xpose.msra.mxu0 0
        %1034 = vmatprep.subr.bf16.mxu0 0
        %1035 = vmatpush1.bf16.xpose.msra.mxu0 0
        %1036 = vmatprep.subr.bf16.mxu0 0
        %1037 = vmatpush1.bf16.xpose.msra.mxu0 0
        %1038 = vmatprep.subr.bf16.mxu0 0
        %1039 = vmatpush1.bf16.xpose.msra.mxu0 0
        %1040 = vmatprep.subr.bf16.mxu0 0
        %1041 = vmatpush1.bf16.xpose.msra.mxu0 0
        %1042 = vmatprep.subr.bf16.mxu0 0
        %1043 = vmatpush1.bf16.xpose.msra.mxu0 0
        %1044 = vmatprep.subr.bf16.mxu0 0
        %1045 = vmatpush1.bf16.xpose.msra.mxu0 0
        %1046 = vmatprep.subr.bf16.mxu0 0
        %1047 = vmatpush1.bf16.xpose.msra.mxu0 0
        %1048 = vmatprep.subr.bf16.mxu0 0
        %1049 = vmatpush1.bf16.xpose.msra.mxu0 0
        %1050 = vmatprep.subr.bf16.mxu0 0
        %1051 = vmatpush1.bf16.xpose.msra.mxu0 0
        %1052 = vmatprep.mubr.bf16.mxu0 0
        %1053 = vmatmul.mubr.bf16.gmra.mrb[0].mxu0 %v1015
        %v1054 = vpop.f32.mrb[0].mxu0
        %v1055 = vadd.f32 %v861, %v1054
        %v1056 = vpop.f32.mrb[0].mxu0
        %v1057 = vpop.f32.mrb[0].mxu0
        %v1058 = vpop.f32.mrb[0].mxu0
        %1059 = vdwg.mxu0
        %v1060 = vsel %vm866, %v908, -inf
        %1061 = vmax.xlane.f32.xlu0 %v1060
        %v1062 = vpop.xlane.xlu0 %1061
        %v1063 = vsel %vm866, %v957, -inf
        %1064 = vmax.xlane.f32.xlu0 %v1063
        %v1065 = vpop.xlane.xlu0 %1064
        %v1066 = vsel %vm866, %v1006, -inf
        %1067 = vmax.xlane.f32.xlu0 %v1066
        %v1068 = vpop.xlane.xlu0 %1067
        %v1069 = vsel %vm866, %v1055, -inf
        %1070 = vmax.xlane.f32.xlu0 %v1069
        %v1071 = vpop.xlane.xlu0 %1070
        %v1072 = vsub.f32 %v908, %v1062
        %v1073 = vsub.f32 %v957, %v1065
        %v1074 = vsub.f32 %v1006, %v1068
        %v1075 = vsub.f32 %v1055, %v1071
        %v1076 = vmul.f32 %v1072, 1.442695
        %v1077 = vpow.pop %v1076
        %v1078 = vmul.f32 %v1073, 1.442695
        %v1079 = vpow.pop %v1078
        %v1080 = vmul.f32 %v1074, 1.442695
        %v1081 = vpow.pop %v1080
        %v1082 = vmul.f32 %v1075, 1.442695
        %v1083 = vpow.pop %v1082
        %v1084 = vsel %vm866, %v1077, 0.0
        %1085 = vadd.xlane.f32.xlu0 %v1084
        %v1086 = vpop.xlane.xlu0 %1085
        %v1087 = vsel %vm866, %v1079, 0.0
        %1088 = vadd.xlane.f32.xlu0 %v1087
        %v1089 = vpop.xlane.xlu0 %1088
        %v1090 = vsel %vm866, %v1081, 0.0
        %1091 = vadd.xlane.f32.xlu0 %v1090
        %v1092 = vpop.xlane.xlu0 %1091
        %v1093 = vsel %vm866, %v1083, 0.0
        %1094 = vadd.xlane.f32.xlu0 %v1093
        %v1095 = vpop.xlane.xlu0 %1094
        %v1096 = vrcp.pop %v1086
        %v1097 = vrcp.pop %v1089
        %v1098 = vrcp.pop %v1092
        %v1099 = vrcp.pop %v1095
        %v1100 = vmul.f32 %v1077, %v1096
        %v1101 = vmul.f32 %v1079, %v1097
        %v1102 = vmul.f32 %v1081, %v1098
        %v1103 = vmul.f32 %v1083, %v1099
        %v1104 = vpack.c.bf16 %v1100, %v1100
        %v1105 = vpack.c.bf16 %v1101, %v1101
        %v1106 = vpack.c.bf16 %v1102, %v1102
        %v1107 = vpack.c.bf16 %v1103, %v1103
        %1108 = vrot.lane.b32.xlu0 %v852, 64
        %v1109 = vpop.permute.xlu0 %1108
        %v1111 = vsel %vm866, %v1104, 0
        %vm1113 = vcmask 1043456
        %v1115 = vsel %vm1113, %v1109, 0
        %1117 = vmatprep.subr.bf16.mxu0 0
        %1118 = vmatpush1.bf16.msra.mxu0 %v1115
        %1119 = vmatprep.subr.bf16.mxu0 0
        %1120 = vmatpush1.bf16.msra.mxu0 0
        %1121 = vmatprep.subr.bf16.mxu0 0
        %1122 = vmatpush1.bf16.msra.mxu0 0
        %1123 = vmatprep.subr.bf16.mxu0 0
        %1124 = vmatpush1.bf16.msra.mxu0 0
        %1125 = vmatprep.subr.bf16.mxu0 0
        %1126 = vmatpush1.bf16.msra.mxu0 0
        %1127 = vmatprep.subr.bf16.mxu0 0
        %1128 = vmatpush1.bf16.msra.mxu0 0
        %1129 = vmatprep.subr.bf16.mxu0 0
        %1130 = vmatpush1.bf16.msra.mxu0 0
        %1131 = vmatprep.subr.bf16.mxu0 0
        %1132 = vmatpush1.bf16.msra.mxu0 0
        %1133 = vmatprep.subr.bf16.mxu0 0
        %1134 = vmatpush1.bf16.msra.mxu0 0
        %1135 = vmatprep.subr.bf16.mxu0 0
        %1136 = vmatpush1.bf16.msra.mxu0 0
        %1137 = vmatprep.subr.bf16.mxu0 0
        %1138 = vmatpush1.bf16.msra.mxu0 0
        %1139 = vmatprep.subr.bf16.mxu0 0
        %1140 = vmatpush1.bf16.msra.mxu0 0
        %1141 = vmatprep.subr.bf16.mxu0 0
        %1142 = vmatpush1.bf16.msra.mxu0 0
        %1143 = vmatprep.subr.bf16.mxu0 0
        %1144 = vmatpush1.bf16.msra.mxu0 0
        %1145 = vmatprep.subr.bf16.mxu0 0
        %1146 = vmatpush1.bf16.msra.mxu0 0
        %1147 = vmatprep.subr.bf16.mxu0 0
        %1148 = vmatpush1.bf16.msra.mxu0 0
        %1149 = vmatprep.mubr.bf16.mxu0 0
        %1150 = vmatmul.mubr.bf16.gmra.mrb[0].mxu0 %v1111
        %v1151 = vpop.f32.mrb[0].mxu0
        %v1152 = vadd.f32 0.0, %v1151
        %v1153 = vpop.f32.mrb[0].mxu0
        %v1154 = vpop.f32.mrb[0].mxu0
        %v1155 = vpop.f32.mrb[0].mxu0
        %1156 = vdwg.mxu0
        %1157 = vrot.lane.b32.xlu0 %v853, 64
        %v1158 = vpop.permute.xlu0 %1157
        %v1160 = vsel %vm866, %v1105, 0
        %v1163 = vsel %vm1113, %v1158, 0
        %1165 = vmatprep.subr.bf16.mxu0 0
        %1166 = vmatpush1.bf16.msra.mxu0 %v1163
        %1167 = vmatprep.subr.bf16.mxu0 0
        %1168 = vmatpush1.bf16.msra.mxu0 0
        %1169 = vmatprep.subr.bf16.mxu0 0
        %1170 = vmatpush1.bf16.msra.mxu0 0
        %1171 = vmatprep.subr.bf16.mxu0 0
        %1172 = vmatpush1.bf16.msra.mxu0 0
        %1173 = vmatprep.subr.bf16.mxu0 0
        %1174 = vmatpush1.bf16.msra.mxu0 0
        %1175 = vmatprep.subr.bf16.mxu0 0
        %1176 = vmatpush1.bf16.msra.mxu0 0
        %1177 = vmatprep.subr.bf16.mxu0 0
        %1178 = vmatpush1.bf16.msra.mxu0 0
        %1179 = vmatprep.subr.bf16.mxu0 0
        %1180 = vmatpush1.bf16.msra.mxu0 0
        %1181 = vmatprep.subr.bf16.mxu0 0
        %1182 = vmatpush1.bf16.msra.mxu0 0
        %1183 = vmatprep.subr.bf16.mxu0 0
        %1184 = vmatpush1.bf16.msra.mxu0 0
        %1185 = vmatprep.subr.bf16.mxu0 0
        %1186 = vmatpush1.bf16.msra.mxu0 0
        %1187 = vmatprep.subr.bf16.mxu0 0
        %1188 = vmatpush1.bf16.msra.mxu0 0
        %1189 = vmatprep.subr.bf16.mxu0 0
        %1190 = vmatpush1.bf16.msra.mxu0 0
        %1191 = vmatprep.subr.bf16.mxu0 0
        %1192 = vmatpush1.bf16.msra.mxu0 0
        %1193 = vmatprep.subr.bf16.mxu0 0
        %1194 = vmatpush1.bf16.msra.mxu0 0
        %1195 = vmatprep.subr.bf16.mxu0 0
        %1196 = vmatpush1.bf16.msra.mxu0 0
        %1197 = vmatprep.mubr.bf16.mxu0 0
        %1198 = vmatmul.mubr.bf16.gmra.mrb[0].mxu0 %v1160
        %v1199 = vpop.f32.mrb[0].mxu0
        %v1200 = vadd.f32 0.0, %v1199
        %v1201 = vpop.f32.mrb[0].mxu0
        %v1202 = vpop.f32.mrb[0].mxu0
        %v1203 = vpop.f32.mrb[0].mxu0
        %1204 = vdwg.mxu0
        %1205 = vrot.lane.b32.xlu0 %v854, 64
        %v1206 = vpop.permute.xlu0 %1205
        %v1208 = vsel %vm866, %v1106, 0
        %v1211 = vsel %vm1113, %v1206, 0
        %1213 = vmatprep.subr.bf16.mxu0 0
        %1214 = vmatpush1.bf16.msra.mxu0 %v1211
        %1215 = vmatprep.subr.bf16.mxu0 0
        %1216 = vmatpush1.bf16.msra.mxu0 0
        %1217 = vmatprep.subr.bf16.mxu0 0
        %1218 = vmatpush1.bf16.msra.mxu0 0
        %1219 = vmatprep.subr.bf16.mxu0 0
        %1220 = vmatpush1.bf16.msra.mxu0 0
        %1221 = vmatprep.subr.bf16.mxu0 0
        %1222 = vmatpush1.bf16.msra.mxu0 0
        %1223 = vmatprep.subr.bf16.mxu0 0
        %1224 = vmatpush1.bf16.msra.mxu0 0
        %1225 = vmatprep.subr.bf16.mxu0 0
        %1226 = vmatpush1.bf16.msra.mxu0 0
        %1227 = vmatprep.subr.bf16.mxu0 0
        %1228 = vmatpush1.bf16.msra.mxu0 0
        %1229 = vmatprep.subr.bf16.mxu0 0
        %1230 = vmatpush1.bf16.msra.mxu0 0
        %1231 = vmatprep.subr.bf16.mxu0 0
        %1232 = vmatpush1.bf16.msra.mxu0 0
        %1233 = vmatprep.subr.bf16.mxu0 0
        %1234 = vmatpush1.bf16.msra.mxu0 0
        %1235 = vmatprep.subr.bf16.mxu0 0
        %1236 = vmatpush1.bf16.msra.mxu0 0
        %1237 = vmatprep.subr.bf16.mxu0 0
        %1238 = vmatpush1.bf16.msra.mxu0 0
        %1239 = vmatprep.subr.bf16.mxu0 0
        %1240 = vmatpush1.bf16.msra.mxu0 0
        %1241 = vmatprep.subr.bf16.mxu0 0
        %1242 = vmatpush1.bf16.msra.mxu0 0
        %1243 = vmatprep.subr.bf16.mxu0 0
        %1244 = vmatpush1.bf16.msra.mxu0 0
        %1245 = vmatprep.mubr.bf16.mxu0 0
        %1246 = vmatmul.mubr.bf16.gmra.mrb[0].mxu0 %v1208
        %v1247 = vpop.f32.mrb[0].mxu0
        %v1248 = vadd.f32 0.0, %v1247
        %v1249 = vpop.f32.mrb[0].mxu0
        %v1250 = vpop.f32.mrb[0].mxu0
        %v1251 = vpop.f32.mrb[0].mxu0
        %1252 = vdwg.mxu0
        %1253 = vrot.lane.b32.xlu0 %v855, 64
        %v1254 = vpop.permute.xlu0 %1253
        %v1256 = vsel %vm866, %v1107, 0
        %v1259 = vsel %vm1113, %v1254, 0
        %1261 = vmatprep.subr.bf16.mxu0 0
        %1262 = vmatpush1.bf16.msra.mxu0 %v1259
        %1263 = vmatprep.subr.bf16.mxu0 0
        %1264 = vmatpush1.bf16.msra.mxu0 0
        %1265 = vmatprep.subr.bf16.mxu0 0
        %1266 = vmatpush1.bf16.msra.mxu0 0
        %1267 = vmatprep.subr.bf16.mxu0 0
        %1268 = vmatpush1.bf16.msra.mxu0 0
        %1269 = vmatprep.subr.bf16.mxu0 0
        %1270 = vmatpush1.bf16.msra.mxu0 0
        %1271 = vmatprep.subr.bf16.mxu0 0
        %1272 = vmatpush1.bf16.msra.mxu0 0
        %1273 = vmatprep.subr.bf16.mxu0 0
        %1274 = vmatpush1.bf16.msra.mxu0 0
        %1275 = vmatprep.subr.bf16.mxu0 0
        %1276 = vmatpush1.bf16.msra.mxu0 0
        %1277 = vmatprep.subr.bf16.mxu0 0
        %1278 = vmatpush1.bf16.msra.mxu0 0
        %1279 = vmatprep.subr.bf16.mxu0 0
        %1280 = vmatpush1.bf16.msra.mxu0 0
        %1281 = vmatprep.subr.bf16.mxu0 0
        %1282 = vmatpush1.bf16.msra.mxu0 0
        %1283 = vmatprep.subr.bf16.mxu0 0
        %1284 = vmatpush1.bf16.msra.mxu0 0
        %1285 = vmatprep.subr.bf16.mxu0 0
        %1286 = vmatpush1.bf16.msra.mxu0 0
        %1287 = vmatprep.subr.bf16.mxu0 0
        %1288 = vmatpush1.bf16.msra.mxu0 0
        %1289 = vmatprep.subr.bf16.mxu0 0
        %1290 = vmatpush1.bf16.msra.mxu0 0
        %1291 = vmatprep.subr.bf16.mxu0 0
        %1292 = vmatpush1.bf16.msra.mxu0 0
        %1293 = vmatprep.mubr.bf16.mxu0 0
        %1294 = vmatmul.mubr.bf16.gmra.mrb[0].mxu0 %v1256
        %v1295 = vpop.f32.mrb[0].mxu0
        %v1296 = vadd.f32 0.0, %v1295
        %v1297 = vpop.f32.mrb[0].mxu0
        %v1298 = vpop.f32.mrb[0].mxu0
        %v1299 = vpop.f32.mrb[0].mxu0
        %1300 = vdwg.mxu0
        %v1301 = vpack.c.bf16 %v1152, %v1152
        %v1302 = vpack.c.bf16 %v1200, %v1200
        %v1303 = vpack.c.bf16 %v1248, %v1248
        %v1304 = vpack.c.bf16 %v1296, %v1296
        %v1305 = vld [vmem:[%s703] sm:$0xf]
        %v1306 = vld [vmem:[%s703 + $0x4] sm:$0xf]
        %v1307 = vld [vmem:[%s703 + $0x8] sm:$0xf]
        %v1308 = vld [vmem:[%s703 + $0xc] sm:$0xf]
        %v1310 = vsel %vm866, %v1301, 0
        %v1313 = vsel %vm1113, %v1305, 0
        %1315 = vmatprep.subr.bf16.mxu0 0
        %1316 = vmatpush1.bf16.msra.mxu0 %v1313
        %1317 = vmatprep.subr.bf16.mxu0 0
        %1318 = vmatpush1.bf16.msra.mxu0 0
        %1319 = vmatprep.subr.bf16.mxu0 0
        %1320 = vmatpush1.bf16.msra.mxu0 0
        %1321 = vmatprep.subr.bf16.mxu0 0
        %1322 = vmatpush1.bf16.msra.mxu0 0
        %1323 = vmatprep.subr.bf16.mxu0 0
        %1324 = vmatpush1.bf16.msra.mxu0 0
        %1325 = vmatprep.subr.bf16.mxu0 0
        %1326 = vmatpush1.bf16.msra.mxu0 0
        %1327 = vmatprep.subr.bf16.mxu0 0
        %1328 = vmatpush1.bf16.msra.mxu0 0
        %1329 = vmatprep.subr.bf16.mxu0 0
        %1330 = vmatpush1.bf16.msra.mxu0 0
        %1331 = vmatprep.subr.bf16.mxu0 0
        %1332 = vmatpush1.bf16.msra.mxu0 0
        %1333 = vmatprep.subr.bf16.mxu0 0
        %1334 = vmatpush1.bf16.msra.mxu0 0
        %1335 = vmatprep.subr.bf16.mxu0 0
        %1336 = vmatpush1.bf16.msra.mxu0 0
        %1337 = vmatprep.subr.bf16.mxu0 0
        %1338 = vmatpush1.bf16.msra.mxu0 0
        %1339 = vmatprep.subr.bf16.mxu0 0
        %1340 = vmatpush1.bf16.msra.mxu0 0
        %1341 = vmatprep.subr.bf16.mxu0 0
        %1342 = vmatpush1.bf16.msra.mxu0 0
        %1343 = vmatprep.subr.bf16.mxu0 0
        %1344 = vmatpush1.bf16.msra.mxu0 0
        %1345 = vmatprep.subr.bf16.mxu0 0
        %1346 = vmatpush1.bf16.msra.mxu0 0
        %1347 = vmatprep.mubr.bf16.mxu0 0
        %1348 = vmatmul.mubr.bf16.gmra.mrb[0].mxu0 %v1310
        %v1349 = vpop.f32.mrb[0].mxu0
        %v1350 = vadd.f32 0.0, %v1349
        %v1351 = vpop.f32.mrb[0].mxu0
        %v1352 = vpop.f32.mrb[0].mxu0
        %v1353 = vpop.f32.mrb[0].mxu0
        %1354 = vdwg.mxu0
        %v1356 = vsel %vm866, %v1302, 0
        %v1359 = vsel %vm1113, %v1306, 0
        %1361 = vmatprep.subr.bf16.mxu0 0
        %1362 = vmatpush1.bf16.msra.mxu0 %v1359
        %1363 = vmatprep.subr.bf16.mxu0 0
        %1364 = vmatpush1.bf16.msra.mxu0 0
        %1365 = vmatprep.subr.bf16.mxu0 0
        %1366 = vmatpush1.bf16.msra.mxu0 0
        %1367 = vmatprep.subr.bf16.mxu0 0
        %1368 = vmatpush1.bf16.msra.mxu0 0
        %1369 = vmatprep.subr.bf16.mxu0 0
        %1370 = vmatpush1.bf16.msra.mxu0 0
        %1371 = vmatprep.subr.bf16.mxu0 0
        %1372 = vmatpush1.bf16.msra.mxu0 0
        %1373 = vmatprep.subr.bf16.mxu0 0
        %1374 = vmatpush1.bf16.msra.mxu0 0
        %1375 = vmatprep.subr.bf16.mxu0 0
        %1376 = vmatpush1.bf16.msra.mxu0 0
        %1377 = vmatprep.subr.bf16.mxu0 0
        %1378 = vmatpush1.bf16.msra.mxu0 0
        %1379 = vmatprep.subr.bf16.mxu0 0
        %1380 = vmatpush1.bf16.msra.mxu0 0
        %1381 = vmatprep.subr.bf16.mxu0 0
        %1382 = vmatpush1.bf16.msra.mxu0 0
        %1383 = vmatprep.subr.bf16.mxu0 0
        %1384 = vmatpush1.bf16.msra.mxu0 0
        %1385 = vmatprep.subr.bf16.mxu0 0
        %1386 = vmatpush1.bf16.msra.mxu0 0
        %1387 = vmatprep.subr.bf16.mxu0 0
        %1388 = vmatpush1.bf16.msra.mxu0 0
        %1389 = vmatprep.subr.bf16.mxu0 0
        %1390 = vmatpush1.bf16.msra.mxu0 0
        %1391 = vmatprep.subr.bf16.mxu0 0
        %1392 = vmatpush1.bf16.msra.mxu0 0
        %1393 = vmatprep.mubr.bf16.mxu0 0
        %1394 = vmatmul.mubr.bf16.gmra.mrb[0].mxu0 %v1356
        %v1395 = vpop.f32.mrb[0].mxu0
        %v1396 = vadd.f32 0.0, %v1395
        %v1397 = vpop.f32.mrb[0].mxu0
        %v1398 = vpop.f32.mrb[0].mxu0
        %v1399 = vpop.f32.mrb[0].mxu0
        %1400 = vdwg.mxu0
        %v1402 = vsel %vm866, %v1303, 0
        %v1405 = vsel %vm1113, %v1307, 0
        %1407 = vmatprep.subr.bf16.mxu0 0
        %1408 = vmatpush1.bf16.msra.mxu0 %v1405
        %1409 = vmatprep.subr.bf16.mxu0 0
        %1410 = vmatpush1.bf16.msra.mxu0 0
        %1411 = vmatprep.subr.bf16.mxu0 0
        %1412 = vmatpush1.bf16.msra.mxu0 0
        %1413 = vmatprep.subr.bf16.mxu0 0
        %1414 = vmatpush1.bf16.msra.mxu0 0
        %1415 = vmatprep.subr.bf16.mxu0 0
        %1416 = vmatpush1.bf16.msra.mxu0 0
        %1417 = vmatprep.subr.bf16.mxu0 0
        %1418 = vmatpush1.bf16.msra.mxu0 0
        %1419 = vmatprep.subr.bf16.mxu0 0
        %1420 = vmatpush1.bf16.msra.mxu0 0
        %1421 = vmatprep.subr.bf16.mxu0 0
        %1422 = vmatpush1.bf16.msra.mxu0 0
        %1423 = vmatprep.subr.bf16.mxu0 0
        %1424 = vmatpush1.bf16.msra.mxu0 0
        %1425 = vmatprep.subr.bf16.mxu0 0
        %1426 = vmatpush1.bf16.msra.mxu0 0
        %1427 = vmatprep.subr.bf16.mxu0 0
        %1428 = vmatpush1.bf16.msra.mxu0 0
        %1429 = vmatprep.subr.bf16.mxu0 0
        %1430 = vmatpush1.bf16.msra.mxu0 0
        %1431 = vmatprep.subr.bf16.mxu0 0
        %1432 = vmatpush1.bf16.msra.mxu0 0
        %1433 = vmatprep.subr.bf16.mxu0 0
        %1434 = vmatpush1.bf16.msra.mxu0 0
        %1435 = vmatprep.subr.bf16.mxu0 0
        %1436 = vmatpush1.bf16.msra.mxu0 0
        %1437 = vmatprep.subr.bf16.mxu0 0
        %1438 = vmatpush1.bf16.msra.mxu0 0
        %1439 = vmatprep.mubr.bf16.mxu0 0
        %1440 = vmatmul.mubr.bf16.gmra.mrb[0].mxu0 %v1402
        %v1441 = vpop.f32.mrb[0].mxu0
        %v1442 = vadd.f32 0.0, %v1441
        %v1443 = vpop.f32.mrb[0].mxu0
        %v1444 = vpop.f32.mrb[0].mxu0
        %v1445 = vpop.f32.mrb[0].mxu0
        %1446 = vdwg.mxu0
        %v1448 = vsel %vm866, %v1304, 0
        %v1451 = vsel %vm1113, %v1308, 0
        %1453 = vmatprep.subr.bf16.mxu0 0
        %1454 = vmatpush1.bf16.msra.mxu0 %v1451
        %1455 = vmatprep.subr.bf16.mxu0 0
        %1456 = vmatpush1.bf16.msra.mxu0 0
        %1457 = vmatprep.subr.bf16.mxu0 0
        %1458 = vmatpush1.bf16.msra.mxu0 0
        %1459 = vmatprep.subr.bf16.mxu0 0
        %1460 = vmatpush1.bf16.msra.mxu0 0
        %1461 = vmatprep.subr.bf16.mxu0 0
        %1462 = vmatpush1.bf16.msra.mxu0 0
        %1463 = vmatprep.subr.bf16.mxu0 0
        %1464 = vmatpush1.bf16.msra.mxu0 0
        %1465 = vmatprep.subr.bf16.mxu0 0
        %1466 = vmatpush1.bf16.msra.mxu0 0
        %1467 = vmatprep.subr.bf16.mxu0 0
        %1468 = vmatpush1.bf16.msra.mxu0 0
        %1469 = vmatprep.subr.bf16.mxu0 0
        %1470 = vmatpush1.bf16.msra.mxu0 0
        %1471 = vmatprep.subr.bf16.mxu0 0
        %1472 = vmatpush1.bf16.msra.mxu0 0
        %1473 = vmatprep.subr.bf16.mxu0 0
        %1474 = vmatpush1.bf16.msra.mxu0 0
        %1475 = vmatprep.subr.bf16.mxu0 0
        %1476 = vmatpush1.bf16.msra.mxu0 0
        %1477 = vmatprep.subr.bf16.mxu0 0
        %1478 = vmatpush1.bf16.msra.mxu0 0
        %1479 = vmatprep.subr.bf16.mxu0 0
        %1480 = vmatpush1.bf16.msra.mxu0 0
        %1481 = vmatprep.subr.bf16.mxu0 0
        %1482 = vmatpush1.bf16.msra.mxu0 0
        %1483 = vmatprep.subr.bf16.mxu0 0
        %1484 = vmatpush1.bf16.msra.mxu0 0
        %1485 = vmatprep.mubr.bf16.mxu0 0
        %1486 = vmatmul.mubr.bf16.gmra.mrb[0].mxu0 %v1448
        %v1487 = vpop.f32.mrb[0].mxu0
        %v1488 = vadd.f32 0.0, %v1487
        %v1489 = vpop.f32.mrb[0].mxu0
        %v1490 = vpop.f32.mrb[0].mxu0
        %v1491 = vpop.f32.mrb[0].mxu0
        %1492 = vdwg.mxu0
        %v1493 = vsel %vm798, %v1350, 0.0
        %v1494 = vsel %vm798, %v1396, 0.0
        %v1495 = vadd.f32 %v1493, %v1494
        %v1496 = vsel %vm798, %v1442, 0.0
        %v1497 = vadd.f32 %v1495, %v1496
        %v1498 = vsel %vm798, %v1488, 0.0
        %v1499 = vadd.f32 %v1497, %v1498
        %v1500 = vld [vmem:[%s706] sm:$0x1]
        %v1502 = vlaneseq
        %v1503 = vshrl.u32 %v1502, 7
        %v1504 = vsub.s32 0, %v1503
        %v1505 = vrot.slane %v1500, %v1504
        %v1507 = vadd.f32 %v1499, %v1505
        %v1508 = vadd.f32 %v773, %v1507
        %v1509 = vld [vmem:[%s709] sm:$0x1]
        %v1510 = vld [vmem:[%s712] sm:$0x1]
        %v1511 = vsel %vm798, %v1508, 0.0
        %1512 = vadd.xlane.f32.xlu0 %v1511
        %v1513 = vpop.xlane.xlu0 %1512
        %v1514 = vrcp.pop 32.0
        %v1515 = vmul.f32 %v1513, %v1514
        %v1516 = vsub.f32 %v1508, %v1515
        %v1517 = vmul.f32 %v1516, %v1516
        %v1518 = vsel %vm798, %v1517, 0.0
        %1519 = vadd.xlane.f32.xlu0 %v1518
        %v1520 = vpop.xlane.xlu0 %1519
        %v1521 = vmul.f32 %v1520, %v1514
        %v1522 = vadd.f32 %v1521, 1e-05
        %v1523 = vrsqrt.pop %v1522
        %v1524 = vmul.f32 %v1516, %v1523
        %v1526 = vlaneseq
        %v1527 = vshrl.u32 %v1526, 7
        %v1528 = vsub.s32 0, %v1527
        %v1529 = vrot.slane %v1509, %v1528
        %v1531 = vmul.f32 %v1524, %v1529
        %v1533 = vlaneseq
        %v1534 = vshrl.u32 %v1533, 7
        %v1535 = vsub.s32 0, %v1534
        %v1536 = vrot.slane %v1510, %v1535
        %v1538 = vadd.f32 %v1531, %v1536
        %v1539 = vpack.c.bf16 %v1538, %v1538
        %v1540 = vld [vmem:[%s717] sm:$0xf]
        %v1541 = vld [vmem:[%s717 + $0x4] sm:$0xf]
        %v1542 = vld [vmem:[%s717 + $0x8] sm:$0xf]
        %v1543 = vld [vmem:[%s717 + $0xc] sm:$0xf]
        %v1544 = vld [vmem:[%s720] sm:$0x1]
        %v1546 = vlaneseq
        %v1547 = vshrl.u32 %v1546, 7
        %v1548 = vsub.s32 0, %v1547
        %v1549 = vrot.slane %v1544, %v1548
        %v1555 = vunpack.c.l.b16 %v1540
        %v1556 = vunpack.c.l.b16 %v1541
        %v1557 = vunpack.c.l.b16 %v1542
        %v1558 = vunpack.c.l.b16 %v1543
        %v1559 = vpack.c.b16 %v1556, %v1555
        %v1560 = vpack.c.b16 %v1558, %v1557
        %v1564 = vsel %vm798, %v1539, 0
        %1566 = vmatprep.subr.bf16.mxu0 0
        %1567 = vmatpush1.bf16.msra.mxu0 %v1559
        %1568 = vmatprep.subr.bf16.mxu0 0
        %1569 = vmatpush1.bf16.msra.mxu0 %v1560
        %1570 = vmatprep.subr.bf16.mxu0 0
        %1571 = vmatpush1.bf16.msra.mxu0 0
        %1572 = vmatprep.subr.bf16.mxu0 0
        %1573 = vmatpush1.bf16.msra.mxu0 0
        %1574 = vmatprep.subr.bf16.mxu0 0
        %1575 = vmatpush1.bf16.msra.mxu0 0
        %1576 = vmatprep.subr.bf16.mxu0 0
        %1577 = vmatpush1.bf16.msra.mxu0 0
        %1578 = vmatprep.subr.bf16.mxu0 0
        %1579 = vmatpush1.bf16.msra.mxu0 0
        %1580 = vmatprep.subr.bf16.mxu0 0
        %1581 = vmatpush1.bf16.msra.mxu0 0
        %1582 = vmatprep.subr.bf16.mxu0 0
        %1583 = vmatpush1.bf16.msra.mxu0 0
        %1584 = vmatprep.subr.bf16.mxu0 0
        %1585 = vmatpush1.bf16.msra.mxu0 0
        %1586 = vmatprep.subr.bf16.mxu0 0
        %1587 = vmatpush1.bf16.msra.mxu0 0
        %1588 = vmatprep.subr.bf16.mxu0 0
        %1589 = vmatpush1.bf16.msra.mxu0 0
        %1590 = vmatprep.subr.bf16.mxu0 0
        %1591 = vmatpush1.bf16.msra.mxu0 0
        %1592 = vmatprep.subr.bf16.mxu0 0
        %1593 = vmatpush1.bf16.msra.mxu0 0
        %1594 = vmatprep.subr.bf16.mxu0 0
        %1595 = vmatpush1.bf16.msra.mxu0 0
        %1596 = vmatprep.subr.bf16.mxu0 0
        %1597 = vmatpush1.bf16.msra.mxu0 0
        %1598 = vmatprep.mubr.bf16.mxu0 0
        %1599 = vmatmul.mubr.bf16.gmra.mrb[0].mxu0 %v1564
        %v1600 = vpop.f32.mrb[0].mxu0
        %v1601 = vadd.f32 %v1549, %v1600
        %v1602 = vpop.f32.mrb[0].mxu0
        %v1603 = vpop.f32.mrb[0].mxu0
        %v1604 = vpop.f32.mrb[0].mxu0
        %1605 = vdwg.mxu0
        %v1606 = vmul.f32 %v1601, 0.5
        %v1607 = vmul.f32 %v1601, 0.044715
        %v1608 = vmul.f32 %v1607, %v1601
        %v1609 = vmul.f32 %v1608, %v1601
        %v1610 = vadd.f32 %v1601, %v1609
        %v1611 = vmul.f32 %v1610, 0.7978846
        %v1612 = vtanh.pop %v1611
        %v1613 = vadd.f32 %v1612, 1.0
        %v1614 = vmul.f32 %v1606, %v1613
        %v1615 = vpack.c.bf16 %v1614, %v1614
        %v1616 = vld [vmem:[%s725] sm:$0xf]
        %v1617 = vld [vmem:[%s725 + $0x4] sm:$0xf]
        %v1618 = vld [vmem:[%s725 + $0x8] sm:$0xf]
        %v1619 = vld [vmem:[%s725 + $0xc] sm:$0xf]
        %v1620 = vld [vmem:[%s725 + $0x10] sm:$0xf]
        %v1621 = vld [vmem:[%s725 + $0x14] sm:$0xf]
        %v1622 = vld [vmem:[%s725 + $0x18] sm:$0xf]
        %v1623 = vld [vmem:[%s725 + $0x1c] sm:$0xf]
        %v1624 = vld [vmem:[%s728] sm:$0x1]
        %v1626 = vlaneseq
        %v1627 = vshrl.u32 %v1626, 7
        %v1628 = vsub.s32 0, %v1627
        %v1629 = vrot.slane %v1624, %v1628
        %v1639 = vunpack.c.l.b16 %v1616
        %v1640 = vunpack.c.l.b16 %v1617
        %v1641 = vunpack.c.l.b16 %v1618
        %v1642 = vunpack.c.l.b16 %v1619
        %v1643 = vunpack.c.l.b16 %v1620
        %v1644 = vunpack.c.l.b16 %v1621
        %v1645 = vunpack.c.l.b16 %v1622
        %v1646 = vunpack.c.l.b16 %v1623
        %v1647 = vpack.c.b16 %v1640, %v1639
        %v1648 = vpack.c.b16 %v1642, %v1641
        %v1649 = vpack.c.b16 %v1644, %v1643
        %v1650 = vpack.c.b16 %v1646, %v1645
        %vm1655 = vcmask 523264
        %v1657 = vsel %vm1655, %v1615, 0
        %1659 = vmatprep.subr.bf16.mxu0 0
        %1660 = vmatpush1.bf16.msra.mxu0 %v1647
        %1661 = vmatprep.subr.bf16.mxu0 0
        %1662 = vmatpush1.bf16.msra.mxu0 %v1648
        %1663 = vmatprep.subr.bf16.mxu0 0
        %1664 = vmatpush1.bf16.msra.mxu0 %v1649
        %1665 = vmatprep.subr.bf16.mxu0 0
        %1666 = vmatpush1.bf16.msra.mxu0 %v1650
        %1667 = vmatprep.subr.bf16.mxu0 0
        %1668 = vmatpush1.bf16.msra.mxu0 0
        %1669 = vmatprep.subr.bf16.mxu0 0
        %1670 = vmatpush1.bf16.msra.mxu0 0
        %1671 = vmatprep.subr.bf16.mxu0 0
        %1672 = vmatpush1.bf16.msra.mxu0 0
        %1673 = vmatprep.subr.bf16.mxu0 0
        %1674 = vmatpush1.bf16.msra.mxu0 0
        %1675 = vmatprep.subr.bf16.mxu0 0
        %1676 = vmatpush1.bf16.msra.mxu0 0
        %1677 = vmatprep.subr.bf16.mxu0 0
        %1678 = vmatpush1.bf16.msra.mxu0 0
        %1679 = vmatprep.subr.bf16.mxu0 0
        %1680 = vmatpush1.bf16.msra.mxu0 0
        %1681 = vmatprep.subr.bf16.mxu0 0
        %1682 = vmatpush1.bf16.msra.mxu0 0
        %1683 = vmatprep.subr.bf16.mxu0 0
        %1684 = vmatpush1.bf16.msra.mxu0 0
        %1685 = vmatprep.subr.bf16.mxu0 0
        %1686 = vmatpush1.bf16.msra.mxu0 0
        %1687 = vmatprep.subr.bf16.mxu0 0
        %1688 = vmatpush1.bf16.msra.mxu0 0
        %1689 = vmatprep.subr.bf16.mxu0 0
        %1690 = vmatpush1.bf16.msra.mxu0 0
        %1691 = vmatprep.mubr.bf16.mxu0 0
        %1692 = vmatmul.mubr.bf16.gmra.mrb[0].mxu0 %v1657
        %v1693 = vpop.f32.mrb[0].mxu0
        %v1694 = vadd.f32 %v1629, %v1693
        %v1695 = vpop.f32.mrb[0].mxu0
        %v1696 = vpop.f32.mrb[0].mxu0
        %v1697 = vpop.f32.mrb[0].mxu0
        %1698 = vdwg.mxu0
        %v1699 = vadd.f32 %v1538, %v1694
        %v1700 = vld [vmem:[%s731] sm:$0x1]
        %v1701 = vld [vmem:[%s734] sm:$0x1]
        %v1702 = vsel %vm798, %v1699, 0.0
        %1703 = vadd.xlane.f32.xlu0 %v1702
        %v1704 = vpop.xlane.xlu0 %1703
        %v1705 = vmul.f32 %v1704, %v1514
        %v1706 = vsub.f32 %v1699, %v1705
        %v1707 = vmul.f32 %v1706, %v1706
        %v1708 = vsel %vm798, %v1707, 0.0
        %1709 = vadd.xlane.f32.xlu0 %v1708
        %v1710 = vpop.xlane.xlu0 %1709
        %v1711 = vmul.f32 %v1710, %v1514
        %v1712 = vadd.f32 %v1711, 1e-05
        %v1713 = vrsqrt.pop %v1712
        %v1714 = vmul.f32 %v1706, %v1713
        %v1716 = vlaneseq
        %v1717 = vshrl.u32 %v1716, 7
        %v1718 = vsub.s32 0, %v1717
        %v1719 = vrot.slane %v1700, %v1718
        %v1721 = vmul.f32 %v1714, %v1719
        %v1723 = vlaneseq
        %v1724 = vshrl.u32 %v1723, 7
        %v1725 = vsub.s32 0, %v1724
        %v1726 = vrot.slane %v1701, %v1725
        %v1728 = vadd.f32 %v1721, %v1726
        %1729 = vst.msk [vmem:[#allocation2] sm:$0xff] %vm798, %v1728
        %p1730 = scmp.eq.s32.totalorder %s35, 1
        // Predicated region
        $region89: #{text_encoder_forward.1} parent=83 // pred_check
          %p1731 = pneg %p1730
        $region90: #{text_encoder_forward.1} parent=83 // pred_check_branch
          %1733 = sbr.rel (%p1731) target = $region92
        $region91: #{text_encoder_forward.1} parent=83 // pred_region
          %1734 = vst.msk [vmem:[%s683] sm:$0xff] %vm798, %v1728
        $region92: #{text_encoder_forward.1} parent=83 // pred_fallthru
          _
        %s1735 = sand.u32 %s456, 1
        %s1736 = scalar_lea.sflag [#allocation4], %s1735
        %s1737 = sand.u32 %s456, 1
        %s1738 = smul.addr %s1737, 8
        %s1739 = scalar_lea.vmem [#allocation3], %s1738
        // Predicated region
        $region93: #{text_encoder_forward.1} parent=83 // pred_check
          %p1740 = pneg %p466
        $region94: #{text_encoder_forward.1} parent=83 // pred_check_branch
          %1742 = sbr.rel (%p1740) target = $region96
        $region95: #{text_encoder_forward.1} parent=83 // pred_region
          %s1744 = ssub.s32 128, 128
          %1745 = vsyncadd %s1736, %s1744
          %s1746 = smul.addr %s34, 128
          %s1747 = scalar_lea.hbm %s16, %s1746
          %s1749 = sshll.u32 %s1739, 4
          %s1750 = int_to_ptr.vmem [resolvable:$true] %s1749
          %1752 = dma.vmem_to_hbm [thread:$0]  %s1750, 128, %s1747, %s1736
        $region96: #{text_encoder_forward.1} parent=83 // pred_fallthru
          _
      $region84: #{text_encoder_forward.1} parent=5 // pred_fallthru
        _
      %p1753 = scmp.le.s32.totalorder 2, %s25
      // Predicated region
      $region97: #{text_encoder_forward.1} parent=5 // pred_check
        %p1754 = pneg %p1753
      $region98: #{text_encoder_forward.1} parent=5 // pred_check_branch
        %1756 = sbr.rel (%p1754) target = $region100
      $region99: #{text_encoder_forward.1} parent=5 // pred_region
        %s1757 = ssub.s32 %s25, 2
        // Predicated region
        $region101: #{text_encoder_forward.1} parent=99 // pred_check
          %p1758 = pneg %p472
        $region102: #{text_encoder_forward.1} parent=99 // pred_check_branch
          %1760 = sbr.rel (%p1758) target = $region104
        $region103: #{text_encoder_forward.1} parent=99 // pred_region
          %s1761 = sand.u32 %s457, 1
          %s1762 = scalar_lea.sflag [#allocation4], %s1761
          %s1763 = sand.u32 %s457, 1
          %s1764 = smul.addr %s1763, 8
          %s1765 = scalar_lea.vmem [#allocation3], %s1764
          %1766 = dma.done %s1762, 128
        $region104: #{text_encoder_forward.1} parent=99 // pred_fallthru
          _
      $region100: #{text_encoder_forward.1} parent=5 // pred_fallthru
        _
    $region6: #{text_encoder_forward.1} parent=1 // loop_footer
      %s29 = sadd.s32 1, %s25
    $region7: #{text_encoder_forward.1} parent=1 // loop_footer_branch
      %24 = sbr.rel target = $region3
    $region8: #{text_encoder_forward.1} parent=1 // loop_exit
      _
    %1767 = vsyncpa [#allocation4], 1
    %s1768 = scalar_lea.sflag [#allocation4], 1
    %1769 = vsyncpa %s1768, 1

</llo_original>
